<compile_context>
chip_gen: v7x
topology: tpu7x:2x2x1
jax: 0.10.0
libtpu: 0.0.40
codegen_flags: <defaults>
</compile_context>

<pallas_src>
import functools

import jax
import jax.numpy as jnp
from jax import lax
from jax.experimental import pallas as pl
from jax.experimental.pallas import tpu as pltpu


def _make_kernel(C_in, O1, O2, K, S, H, W, H_out, W_out, pad):
    def kernel(x_ref, w1_ref, b1_ref, w2l_ref, b2l_ref, out_ref, *scratch):
        # x_ref  : VMEM (1, C_in, H, W)            raw (unpadded) input image
        # w1_ref : SMEM (O1, C_in*K)               conv1 taps * BN1 scale
        # b1_ref : SMEM (O1,)                      BN1 shift
        # w2l_ref: VMEM (O1, K, 1, O2*W_out)       conv2 taps * BN2 scale,
        #                                          lane-expanded per i2 block
        # b2l_ref: VMEM (O1, 1, O2*W_out)          BN2 shift, lane-expanded
        # out_ref: VMEM (1, H_out, C_out*W_out)    lane-packed output slab
        # scratch: () when S == 1, else (xpad, ypad) VMEM halo buffers.
        f32 = jnp.float32
        w2all = w2l_ref[...]            # (O1, K, 1, O2*W_out)
        b2all = b2l_ref[...]            # (O1, 1, O2*W_out)
        x_all = x_ref[0].astype(f32)    # (C_in, H, W)

        # ---- vertically shifted row views per (channel, tap) ----
        if S == 1:
            # Fully in-register: pad with value concatenation, taps are static
            # slices.  No scratch copy, no halo zeroing.
            zrow = jnp.zeros((pad, W), f32) if pad > 0 else None
            xrows = []
            for c in range(C_in):
                xc = x_all[c]
                xp = (jnp.concatenate([zrow, xc, zrow], axis=0)
                      if pad > 0 else xc)                       # (H+2p, W)
                xrows.append([xp[t:t + H_out] for t in range(K)])
        else:
            # Strided path: vertical / horizontal decimation via ref-level
            # pl.ds(..., stride=S) through small VMEM halo scratches.
            xpad, ypad = scratch
            # NOTE: halos are re-zeroed every step (cheap) instead of only at
            # program_id==0: under megacore "parallel" sharding a core may
            # never execute pid==0, so pl.when(pid==0) init on scratch would be
            # unsafe.
            if pad > 0:
                xpad[:, :pad, :] = jnp.zeros((C_in, pad, W), f32)
                xpad[:, pad + H:, :] = jnp.zeros((C_in, pad, W), f32)
                ypad[:, :pad] = jnp.zeros((H_out, pad), f32)
                ypad[:, pad + W:] = jnp.zeros((H_out, pad), f32)
            xpad[:, pad:pad + H, :] = x_all
            xrows = [[xpad[c, pl.ds(t, H_out, stride=S), :] for t in range(K)]
                     for c in range(C_in)]

        # ---- per group: conv1 + BN1, then conv2 + BN2 + ReLU6 (fused) ----
        slabs = []
        for o1 in range(O1):
            # conv1: (K x 1), stride (S, 1), full conv over C_in, folded BN1.
            acc = jnp.zeros((H_out, W), f32)
            for c in range(C_in):
                for t in range(K):
                    acc = acc + w1_ref[o1, c * K + t] * xrows[c][t]
            y = acc + b1_ref[o1]                               # (H_out, W)

            # Horizontal taps for conv2 (zero padding applied to the BN1
            # output, exactly like nn.Conv2d's own padding).
            if S == 1:
                if pad > 0:
                    zcol = jnp.zeros((H_out, pad), f32)
                    yp = jnp.concatenate([zcol, y, zcol], axis=1)
                else:
                    yp = y
                taps = [yp[:, t:t + W_out] for t in range(K)]
            else:
                ypad[:, pad:pad + W] = y
                taps = [ypad[:, pl.ds(t, W_out, stride=S)] for t in range(K)]

            # conv2: (1 x K), groups=O1, folded BN2 — vectorized across i2 by
            # packing the O2 output channels of this group along lanes.
            acc2 = jnp.zeros((H_out, O2 * W_out), f32)
            for t in range(K):
                tiled = (jnp.concatenate([taps[t]] * O2, axis=1)
                         if O2 > 1 else taps[t])               # (H_out, O2*W_out)
                acc2 = acc2 + w2all[o1, t] * tiled
            slabs.append(jnp.clip(acc2 + b2all[o1], 0.0, 6.0))  # BN2 shift + ReLU6

        # One lane-dense store per image: (H_out, C_out*W_out).
        final = jnp.concatenate(slabs, axis=1) if O1 > 1 else slabs[0]
        out_ref[0] = final.astype(out_ref.dtype)

    return kernel


def stem_forward(x, w1, s1, b1, w2, s2, b2, *, outs, kernel_size, stride):
    """Fused SpatialSepConvSF + ReLU6 (the Stem forward), eval-mode BN.

    x : (N, C_in, H, W) f32
    w1: (O1, C_in, K, 1)     conv1 weight
    w2: (O1*O2, 1, 1, K)     conv2 weight (groups=O1)
    s1/b1: (O1,)             folded BN1 scale / shift
    s2/b2: (O1*O2,)          folded BN2 scale / shift
    """
    N, C_in, H, W = x.shape
    O1, O2 = outs
    K, S = kernel_size, stride
    pad = K // 2
    H_out = (H + 2 * pad - K) // S + 1
    W_out = (W + 2 * pad - K) // S + 1
    C_out = O1 * O2
    f32 = jnp.float32

    # One-time parameter transforms (host/XLA side, not per-sample):
    #  - fold BN scales into conv taps,
    #  - lane-expand conv2 taps / BN2 shifts so conv2 is vectorized over i2.
    w1s = (w1[:, :, :, 0] * s1[:, None, None]).reshape(O1, C_in * K).astype(f32)
    b1f = b1.astype(f32)
    w2g = (w2[:, 0, 0, :] * s2[:, None]).reshape(O1, O2, K).astype(f32)  # [o1,i2,t]
    w2lane = jnp.broadcast_to(
        jnp.transpose(w2g, (0, 2, 1))[:, :, :, None],
        (O1, K, O2, W_out)).reshape(O1, K, 1, O2 * W_out)
    b2lane = jnp.broadcast_to(
        b2.reshape(O1, O2).astype(f32)[:, :, None],
        (O1, O2, W_out)).reshape(O1, 1, O2 * W_out)

    kernel = _make_kernel(C_in, O1, O2, K, S, H, W, H_out, W_out, pad)
    smem = pl.BlockSpec(memory_space=pltpu.MemorySpace.SMEM)
    scratch = []
    if S != 1:  # halo scratches only needed on the strided path
        scratch = [pltpu.VMEM((C_in, H + 2 * pad, W), f32),
                   pltpu.VMEM((H_out, W + 2 * pad), f32)]

    out_k = pl.pallas_call(
        kernel,
        out_shape=jax.ShapeDtypeStruct((N, H_out, C_out * W_out), x.dtype),
        grid_spec=pltpu.PrefetchScalarGridSpec(
            num_scalar_prefetch=0,
            grid=(N,),
            in_specs=[
                pl.BlockSpec((1, C_in, H, W), lambda n: (n, 0, 0, 0)),
                smem, smem,
                pl.BlockSpec((O1, K, 1, O2 * W_out), lambda n: (0, 0, 0, 0)),
                pl.BlockSpec((O1, 1, O2 * W_out), lambda n: (0, 0, 0)),
            ],
            out_specs=pl.BlockSpec((1, H_out, C_out * W_out),
                                   lambda n: (n, 0, 0)),
            scratch_shapes=scratch,
        ),
        compiler_params=pltpu.CompilerParams(
            dimension_semantics=("parallel",)),
    )(x, w1s, b1f, w2lane, b2lane)

    # Undo the lane packing and apply ChannelShuffle(groups=O1) outside the
    # kernel: lane block index is (o1*O2 + i2); shuffled channel is i2*O1 + o1.
    out = out_k.reshape(N, H_out, O1, O2, W_out)
    out = out.transpose(0, 3, 2, 1, 4).reshape(N, C_out, H_out, W_out)
    return out


def _fold_bn(gamma, beta, mean, var, eps=1e-5):
    scale = gamma / jnp.sqrt(var + eps)
    shift = beta - mean * scale
    return scale, shift


def _reference(x, w1, s1, b1, w2, s2, b2, *, O1, K, S):
    """Pure-JAX reference for the Stem forward (eval-mode BN)."""
    pad = K // 2
    y = lax.conv_general_dilated(
        x, w1, (S, 1), ((pad, pad), (0, 0)),
        dimension_numbers=("NCHW", "OIHW", "NCHW"), feature_group_count=1)
    y = y * s1[None, :, None, None] + b1[None, :, None, None]
    z = lax.conv_general_dilated(
        y, w2, (1, S), ((0, 0), (pad, pad)),
        dimension_numbers=("NCHW", "OIHW", "NCHW"), feature_group_count=O1)
    z = z * s2[None, :, None, None] + b2[None, :, None, None]
    n, c, h, w = z.shape
    O2 = c // O1
    z = z.reshape(n, O1, O2, h, w).transpose(0, 2, 1, 3, 4).reshape(n, c, h, w)
    return jnp.clip(z, 0.0, 6.0)  # ReLU6


if __name__ == "__main__":
    # Module config (constructor args) and small shapes.
    in_channels = 4
    outs = (4, 4)          # Stem default (O1, O2)
    kernel_size = 3
    stride = 1
    N, H, W = 2, 16, 16

    O1, O2 = outs
    C_mid = O1
    C_out = O1 * O2

    keys = jax.random.split(jax.random.PRNGKey(0), 12)
    x = jax.random.normal(keys[0], (N, in_channels, H, W), jnp.float32)

    # Deterministic synthetic parameters (shapes per the module's __init__).
    w1 = 0.5 * jax.random.normal(keys[1], (O1, in_channels, kernel_size, 1),
                                 jnp.float32)
    w2 = 0.5 * jax.random.normal(keys[2], (C_out, 1, 1, kernel_size),
                                 jnp.float32)
    gamma1 = 1.0 + 0.1 * jax.random.normal(keys[3], (C_mid,), jnp.float32)
    beta1 = 0.1 * jax.random.normal(keys[4], (C_mid,), jnp.float32)
    mean1 = 0.1 * jax.random.normal(keys[5], (C_mid,), jnp.float32)
    var1 = jax.nn.softplus(jax.random.normal(keys[6], (C_mid,),
                                             jnp.float32)) + 0.5
    gamma2 = 1.0 + 0.1 * jax.random.normal(keys[7], (C_out,), jnp.float32)
    beta2 = 0.1 * jax.random.normal(keys[8], (C_out,), jnp.float32)
    mean2 = 0.1 * jax.random.normal(keys[9], (C_out,), jnp.float32)
    var2 = jax.nn.softplus(jax.random.normal(keys[10], (C_out,),
                                             jnp.float32)) + 0.5

    s1, b1 = _fold_bn(gamma1, beta1, mean1, var1)
    s2, b2 = _fold_bn(gamma2, beta2, mean2, var2)

    run = functools.partial(stem_forward, outs=outs, kernel_size=kernel_size,
                            stride=stride)
    out = jax.jit(run)(x, w1, s1, b1, w2, s2, b2)
    out = jax.block_until_ready(out)

    ref = _reference(x, w1, s1, b1, w2, s2, b2, O1=O1, K=kernel_size, S=stride)
    ref = jax.block_until_ready(ref)

    pad = kernel_size // 2
    H_out = (H + 2 * pad - kernel_size) // stride + 1
    W_out = (W + 2 * pad - kernel_size) // stride + 1
    assert out.shape == (N, C_out, H_out, W_out), out.shape
    assert out.shape == ref.shape, (out.shape, ref.shape)
    assert jnp.allclose(out, ref, rtol=1e-3, atol=1e-4), (
        float(jnp.max(jnp.abs(out - ref))))
    print("KERNEL_OK")
</pallas_src>

<mosaic_0001>
module attributes {stable_mosaic.version = 11 : i64} {
  func.func @kernel(%arg0: i32, %arg1: memref<1x4x16x16xf32, #tpu.memory_space<vmem>>, %arg2: memref<4x12xf32, #tpu.memory_space<smem>>, %arg3: memref<4xf32, #tpu.memory_space<smem>>, %arg4: memref<4x3x1x64xf32, #tpu.memory_space<vmem>>, %arg5: memref<4x1x64xf32, #tpu.memory_space<vmem>>, %arg6: memref<1x16x256xf32, #tpu.memory_space<vmem>>) attributes {dimension_semantics = [#tpu.dimension_semantics<parallel>], iteration_bounds = array<i64: 2>, scalar_prefetch = 0 : i64, scratch_operands = 0 : i64, tpu.core_type = #tpu.core_type<tc>, window_params = [{transform_indices = @transform_0, window_bounds = array<i64: 1, 4, 16, 16>}, {transform_indices = @transform_1, window_bounds = array<i64: 4, 12>}, {transform_indices = @transform_2, window_bounds = array<i64: 4>}, {pipeline_mode = #tpu.pipeline_mode<synchronous>, transform_indices = @transform_3, window_bounds = array<i64: 4, 3, 1, 64>}, {pipeline_mode = #tpu.pipeline_mode<synchronous>, transform_indices = @transform_4, window_bounds = array<i64: 4, 1, 64>}, {transform_indices = @transform_5, window_bounds = array<i64: 1, 16, 256>}]} {
    %c0 = arith.constant 0 : index
    %c0_0 = arith.constant 0 : index
    %c0_1 = arith.constant 0 : index
    %c0_2 = arith.constant 0 : index
    %0 = vector.load %arg4[%c0, %c0_0, %c0_1, %c0_2] : memref<4x3x1x64xf32, #tpu.memory_space<vmem>>, vector<4x3x1x64xf32>
    %c0_3 = arith.constant 0 : index
    %c0_4 = arith.constant 0 : index
    %c0_5 = arith.constant 0 : index
    %1 = vector.load %arg5[%c0_3, %c0_4, %c0_5] : memref<4x1x64xf32, #tpu.memory_space<vmem>>, vector<4x1x64xf32>
    %c0_6 = arith.constant 0 : index
    %c0_7 = arith.constant 0 : index
    %c0_8 = arith.constant 0 : index
    %c0_9 = arith.constant 0 : index
    %2 = vector.load %arg1[%c0_6, %c0_7, %c0_8, %c0_9] : memref<1x4x16x16xf32, #tpu.memory_space<vmem>>, vector<1x4x16x16xf32>
    %3 = vector.shape_cast %2 : vector<1x4x16x16xf32> to vector<4x16x16xf32>
    %cst = arith.constant 0.000000e+00 : f32
    %4 = vector.broadcast %cst : f32 to vector<1x16xf32>
    %5 = vector.extract_strided_slice %3 {offsets = [0, 0, 0], sizes = [1, 16, 16], strides = [1, 1, 1]} : vector<4x16x16xf32> to vector<1x16x16xf32>
    %6 = vector.shape_cast %5 : vector<1x16x16xf32> to vector<16x16xf32>
    %7 = tpu.concatenate %4, %6, %4 in 0 : vector<1x16xf32>, vector<16x16xf32>, vector<1x16xf32> -> vector<18x16xf32>
    %8 = vector.extract_strided_slice %7 {offsets = [0, 0], sizes = [16, 16], strides = [1, 1]} : vector<18x16xf32> to vector<16x16xf32>
    %9 = vector.extract_strided_slice %7 {offsets = [1, 0], sizes = [16, 16], strides = [1, 1]} : vector<18x16xf32> to vector<16x16xf32>
    %10 = vector.extract_strided_slice %7 {offsets = [2, 0], sizes = [16, 16], strides = [1, 1]} : vector<18x16xf32> to vector<16x16xf32>
    %11 = vector.extract_strided_slice %3 {offsets = [1, 0, 0], sizes = [1, 16, 16], strides = [1, 1, 1]} : vector<4x16x16xf32> to vector<1x16x16xf32>
    %12 = vector.shape_cast %11 : vector<1x16x16xf32> to vector<16x16xf32>
    %13 = tpu.concatenate %4, %12, %4 in 0 : vector<1x16xf32>, vector<16x16xf32>, vector<1x16xf32> -> vector<18x16xf32>
    %14 = vector.extract_strided_slice %13 {offsets = [0, 0], sizes = [16, 16], strides = [1, 1]} : vector<18x16xf32> to vector<16x16xf32>
    %15 = vector.extract_strided_slice %13 {offsets = [1, 0], sizes = [16, 16], strides = [1, 1]} : vector<18x16xf32> to vector<16x16xf32>
    %16 = vector.extract_strided_slice %13 {offsets = [2, 0], sizes = [16, 16], strides = [1, 1]} : vector<18x16xf32> to vector<16x16xf32>
    %17 = vector.extract_strided_slice %3 {offsets = [2, 0, 0], sizes = [1, 16, 16], strides = [1, 1, 1]} : vector<4x16x16xf32> to vector<1x16x16xf32>
    %18 = vector.shape_cast %17 : vector<1x16x16xf32> to vector<16x16xf32>
    %19 = tpu.concatenate %4, %18, %4 in 0 : vector<1x16xf32>, vector<16x16xf32>, vector<1x16xf32> -> vector<18x16xf32>
    %20 = vector.extract_strided_slice %19 {offsets = [0, 0], sizes = [16, 16], strides = [1, 1]} : vector<18x16xf32> to vector<16x16xf32>
    %21 = vector.extract_strided_slice %19 {offsets = [1, 0], sizes = [16, 16], strides = [1, 1]} : vector<18x16xf32> to vector<16x16xf32>
    %22 = vector.extract_strided_slice %19 {offsets = [2, 0], sizes = [16, 16], strides = [1, 1]} : vector<18x16xf32> to vector<16x16xf32>
    %23 = vector.extract_strided_slice %3 {offsets = [3, 0, 0], sizes = [1, 16, 16], strides = [1, 1, 1]} : vector<4x16x16xf32> to vector<1x16x16xf32>
    %24 = vector.shape_cast %23 : vector<1x16x16xf32> to vector<16x16xf32>
    %25 = tpu.concatenate %4, %24, %4 in 0 : vector<1x16xf32>, vector<16x16xf32>, vector<1x16xf32> -> vector<18x16xf32>
    %26 = vector.extract_strided_slice %25 {offsets = [0, 0], sizes = [16, 16], strides = [1, 1]} : vector<18x16xf32> to vector<16x16xf32>
    %27 = vector.extract_strided_slice %25 {offsets = [1, 0], sizes = [16, 16], strides = [1, 1]} : vector<18x16xf32> to vector<16x16xf32>
    %28 = vector.extract_strided_slice %25 {offsets = [2, 0], sizes = [16, 16], strides = [1, 1]} : vector<18x16xf32> to vector<16x16xf32>
    %cst_10 = arith.constant 0.000000e+00 : f32
    %29 = vector.broadcast %cst_10 : f32 to vector<16x16xf32>
    %c0_11 = arith.constant 0 : index
    %c0_12 = arith.constant 0 : index
    %30 = memref.load %arg2[%c0_11, %c0_12] : memref<4x12xf32, #tpu.memory_space<smem>>
    %31 = vector.broadcast %30 : f32 to vector<16x16xf32>
    %32 = arith.mulf %31, %8 : vector<16x16xf32>
    %33 = arith.addf %29, %32 : vector<16x16xf32>
    %c0_13 = arith.constant 0 : index
    %c1 = arith.constant 1 : index
    %34 = memref.load %arg2[%c0_13, %c1] : memref<4x12xf32, #tpu.memory_space<smem>>
    %35 = vector.broadcast %34 : f32 to vector<16x16xf32>
    %36 = arith.mulf %35, %9 : vector<16x16xf32>
    %37 = arith.addf %33, %36 : vector<16x16xf32>
    %c0_14 = arith.constant 0 : index
    %c2 = arith.constant 2 : index
    %38 = memref.load %arg2[%c0_14, %c2] : memref<4x12xf32, #tpu.memory_space<smem>>
    %39 = vector.broadcast %38 : f32 to vector<16x16xf32>
    %40 = arith.mulf %39, %10 : vector<16x16xf32>
    %41 = arith.addf %37, %40 : vector<16x16xf32>
    %c0_15 = arith.constant 0 : index
    %c3 = arith.constant 3 : index
    %42 = memref.load %arg2[%c0_15, %c3] : memref<4x12xf32, #tpu.memory_space<smem>>
    %43 = vector.broadcast %42 : f32 to vector<16x16xf32>
    %44 = arith.mulf %43, %14 : vector<16x16xf32>
    %45 = arith.addf %41, %44 : vector<16x16xf32>
    %c0_16 = arith.constant 0 : index
    %c4 = arith.constant 4 : index
    %46 = memref.load %arg2[%c0_16, %c4] : memref<4x12xf32, #tpu.memory_space<smem>>
    %47 = vector.broadcast %46 : f32 to vector<16x16xf32>
    %48 = arith.mulf %47, %15 : vector<16x16xf32>
    %49 = arith.addf %45, %48 : vector<16x16xf32>
    %c0_17 = arith.constant 0 : index
    %c5 = arith.constant 5 : index
    %50 = memref.load %arg2[%c0_17, %c5] : memref<4x12xf32, #tpu.memory_space<smem>>
    %51 = vector.broadcast %50 : f32 to vector<16x16xf32>
    %52 = arith.mulf %51, %16 : vector<16x16xf32>
    %53 = arith.addf %49, %52 : vector<16x16xf32>
    %c0_18 = arith.constant 0 : index
    %c6 = arith.constant 6 : index
    %54 = memref.load %arg2[%c0_18, %c6] : memref<4x12xf32, #tpu.memory_space<smem>>
    %55 = vector.broadcast %54 : f32 to vector<16x16xf32>
    %56 = arith.mulf %55, %20 : vector<16x16xf32>
    %57 = arith.addf %53, %56 : vector<16x16xf32>
    %c0_19 = arith.constant 0 : index
    %c7 = arith.constant 7 : index
    %58 = memref.load %arg2[%c0_19, %c7] : memref<4x12xf32, #tpu.memory_space<smem>>
    %59 = vector.broadcast %58 : f32 to vector<16x16xf32>
    %60 = arith.mulf %59, %21 : vector<16x16xf32>
    %61 = arith.addf %57, %60 : vector<16x16xf32>
    %c0_20 = arith.constant 0 : index
    %c8 = arith.constant 8 : index
    %62 = memref.load %arg2[%c0_20, %c8] : memref<4x12xf32, #tpu.memory_space<smem>>
    %63 = vector.broadcast %62 : f32 to vector<16x16xf32>
    %64 = arith.mulf %63, %22 : vector<16x16xf32>
    %65 = arith.addf %61, %64 : vector<16x16xf32>
    %c0_21 = arith.constant 0 : index
    %c9 = arith.constant 9 : index
    %66 = memref.load %arg2[%c0_21, %c9] : memref<4x12xf32, #tpu.memory_space<smem>>
    %67 = vector.broadcast %66 : f32 to vector<16x16xf32>
    %68 = arith.mulf %67, %26 : vector<16x16xf32>
    %69 = arith.addf %65, %68 : vector<16x16xf32>
    %c0_22 = arith.constant 0 : index
    %c10 = arith.constant 10 : index
    %70 = memref.load %arg2[%c0_22, %c10] : memref<4x12xf32, #tpu.memory_space<smem>>
    %71 = vector.broadcast %70 : f32 to vector<16x16xf32>
    %72 = arith.mulf %71, %27 : vector<16x16xf32>
    %73 = arith.addf %69, %72 : vector<16x16xf32>
    %c0_23 = arith.constant 0 : index
    %c11 = arith.constant 11 : index
    %74 = memref.load %arg2[%c0_23, %c11] : memref<4x12xf32, #tpu.memory_space<smem>>
    %75 = vector.broadcast %74 : f32 to vector<16x16xf32>
    %76 = arith.mulf %75, %28 : vector<16x16xf32>
    %77 = arith.addf %73, %76 : vector<16x16xf32>
    %c0_24 = arith.constant 0 : index
    %78 = memref.load %arg3[%c0_24] : memref<4xf32, #tpu.memory_space<smem>>
    %79 = vector.broadcast %78 : f32 to vector<16x16xf32>
    %80 = arith.addf %77, %79 : vector<16x16xf32>
    %cst_25 = arith.constant 0.000000e+00 : f32
    %81 = vector.broadcast %cst_25 : f32 to vector<16x1xf32>
    %82 = tpu.concatenate %81, %80, %81 in 1 : vector<16x1xf32>, vector<16x16xf32>, vector<16x1xf32> -> vector<16x18xf32>
    %83 = vector.extract_strided_slice %82 {offsets = [0, 0], sizes = [16, 16], strides = [1, 1]} : vector<16x18xf32> to vector<16x16xf32>
    %84 = vector.extract_strided_slice %82 {offsets = [0, 1], sizes = [16, 16], strides = [1, 1]} : vector<16x18xf32> to vector<16x16xf32>
    %85 = vector.extract_strided_slice %82 {offsets = [0, 2], sizes = [16, 16], strides = [1, 1]} : vector<16x18xf32> to vector<16x16xf32>
    %cst_26 = arith.constant 0.000000e+00 : f32
    %86 = vector.broadcast %cst_26 : f32 to vector<16x64xf32>
    %87 = tpu.concatenate %83, %83, %83, %83 in 1 : vector<16x16xf32>, vector<16x16xf32>, vector<16x16xf32>, vector<16x16xf32> -> vector<16x64xf32>
    %88 = vector.extract_strided_slice %0 {offsets = [0, 0, 0, 0], sizes = [1, 1, 1, 64], strides = [1, 1, 1, 1]} : vector<4x3x1x64xf32> to vector<1x1x1x64xf32>
    %89 = vector.shape_cast %88 : vector<1x1x1x64xf32> to vector<1x64xf32>
    %90 = vector.broadcast %89 : vector<1x64xf32> to vector<16x64xf32>
    %91 = arith.mulf %90, %87 : vector<16x64xf32>
    %92 = arith.addf %86, %91 : vector<16x64xf32>
    %93 = tpu.concatenate %84, %84, %84, %84 in 1 : vector<16x16xf32>, vector<16x16xf32>, vector<16x16xf32>, vector<16x16xf32> -> vector<16x64xf32>
    %94 = vector.extract_strided_slice %0 {offsets = [0, 1, 0, 0], sizes = [1, 1, 1, 64], strides = [1, 1, 1, 1]} : vector<4x3x1x64xf32> to vector<1x1x1x64xf32>
    %95 = vector.shape_cast %94 : vector<1x1x1x64xf32> to vector<1x64xf32>
    %96 = vector.broadcast %95 : vector<1x64xf32> to vector<16x64xf32>
    %97 = arith.mulf %96, %93 : vector<16x64xf32>
    %98 = arith.addf %92, %97 : vector<16x64xf32>
    %99 = tpu.concatenate %85, %85, %85, %85 in 1 : vector<16x16xf32>, vector<16x16xf32>, vector<16x16xf32>, vector<16x16xf32> -> vector<16x64xf32>
    %100 = vector.extract_strided_slice %0 {offsets = [0, 2, 0, 0], sizes = [1, 1, 1, 64], strides = [1, 1, 1, 1]} : vector<4x3x1x64xf32> to vector<1x1x1x64xf32>
    %101 = vector.shape_cast %100 : vector<1x1x1x64xf32> to vector<1x64xf32>
    %102 = vector.broadcast %101 : vector<1x64xf32> to vector<16x64xf32>
    %103 = arith.mulf %102, %99 : vector<16x64xf32>
    %104 = arith.addf %98, %103 : vector<16x64xf32>
    %105 = vector.extract_strided_slice %1 {offsets = [0, 0, 0], sizes = [1, 1, 64], strides = [1, 1, 1]} : vector<4x1x64xf32> to vector<1x1x64xf32>
    %106 = vector.shape_cast %105 : vector<1x1x64xf32> to vector<1x64xf32>
    %107 = vector.broadcast %106 : vector<1x64xf32> to vector<16x64xf32>
    %108 = arith.addf %104, %107 : vector<16x64xf32>
    %cst_27 = arith.constant 0.000000e+00 : f32
    %cst_28 = arith.constant 6.000000e+00 : f32
    %109 = vector.broadcast %cst_27 : f32 to vector<16x64xf32>
    %110 = arith.maximumf %109, %108 : vector<16x64xf32>
    %111 = vector.broadcast %cst_28 : f32 to vector<16x64xf32>
    %112 = arith.minimumf %111, %110 : vector<16x64xf32>
    %cst_29 = arith.constant 0.000000e+00 : f32
    %113 = vector.broadcast %cst_29 : f32 to vector<16x16xf32>
    %c1_30 = arith.constant 1 : index
    %c0_31 = arith.constant 0 : index
    %114 = memref.load %arg2[%c1_30, %c0_31] : memref<4x12xf32, #tpu.memory_space<smem>>
    %115 = vector.broadcast %114 : f32 to vector<16x16xf32>
    %116 = arith.mulf %115, %8 : vector<16x16xf32>
    %117 = arith.addf %113, %116 : vector<16x16xf32>
    %c1_32 = arith.constant 1 : index
    %c1_33 = arith.constant 1 : index
    %118 = memref.load %arg2[%c1_32, %c1_33] : memref<4x12xf32, #tpu.memory_space<smem>>
    %119 = vector.broadcast %118 : f32 to vector<16x16xf32>
    %120 = arith.mulf %119, %9 : vector<16x16xf32>
    %121 = arith.addf %117, %120 : vector<16x16xf32>
    %c1_34 = arith.constant 1 : index
    %c2_35 = arith.constant 2 : index
    %122 = memref.load %arg2[%c1_34, %c2_35] : memref<4x12xf32, #tpu.memory_space<smem>>
    %123 = vector.broadcast %122 : f32 to vector<16x16xf32>
    %124 = arith.mulf %123, %10 : vector<16x16xf32>
    %125 = arith.addf %121, %124 : vector<16x16xf32>
    %c1_36 = arith.constant 1 : index
    %c3_37 = arith.constant 3 : index
    %126 = memref.load %arg2[%c1_36, %c3_37] : memref<4x12xf32, #tpu.memory_space<smem>>
    %127 = vector.broadcast %126 : f32 to vector<16x16xf32>
    %128 = arith.mulf %127, %14 : vector<16x16xf32>
    %129 = arith.addf %125, %128 : vector<16x16xf32>
    %c1_38 = arith.constant 1 : index
    %c4_39 = arith.constant 4 : index
    %130 = memref.load %arg2[%c1_38, %c4_39] : memref<4x12xf32, #tpu.memory_space<smem>>
    %131 = vector.broadcast %130 : f32 to vector<16x16xf32>
    %132 = arith.mulf %131, %15 : vector<16x16xf32>
    %133 = arith.addf %129, %132 : vector<16x16xf32>
    %c1_40 = arith.constant 1 : index
    %c5_41 = arith.constant 5 : index
    %134 = memref.load %arg2[%c1_40, %c5_41] : memref<4x12xf32, #tpu.memory_space<smem>>
    %135 = vector.broadcast %134 : f32 to vector<16x16xf32>
    %136 = arith.mulf %135, %16 : vector<16x16xf32>
    %137 = arith.addf %133, %136 : vector<16x16xf32>
    %c1_42 = arith.constant 1 : index
    %c6_43 = arith.constant 6 : index
    %138 = memref.load %arg2[%c1_42, %c6_43] : memref<4x12xf32, #tpu.memory_space<smem>>
    %139 = vector.broadcast %138 : f32 to vector<16x16xf32>
    %140 = arith.mulf %139, %20 : vector<16x16xf32>
    %141 = arith.addf %137, %140 : vector<16x16xf32>
    %c1_44 = arith.constant 1 : index
    %c7_45 = arith.constant 7 : index
    %142 = memref.load %arg2[%c1_44, %c7_45] : memref<4x12xf32, #tpu.memory_space<smem>>
    %143 = vector.broadcast %142 : f32 to vector<16x16xf32>
    %144 = arith.mulf %143, %21 : vector<16x16xf32>
    %145 = arith.addf %141, %144 : vector<16x16xf32>
    %c1_46 = arith.constant 1 : index
    %c8_47 = arith.constant 8 : index
    %146 = memref.load %arg2[%c1_46, %c8_47] : memref<4x12xf32, #tpu.memory_space<smem>>
    %147 = vector.broadcast %146 : f32 to vector<16x16xf32>
    %148 = arith.mulf %147, %22 : vector<16x16xf32>
    %149 = arith.addf %145, %148 : vector<16x16xf32>
    %c1_48 = arith.constant 1 : index
    %c9_49 = arith.constant 9 : index
    %150 = memref.load %arg2[%c1_48, %c9_49] : memref<4x12xf32, #tpu.memory_space<smem>>
    %151 = vector.broadcast %150 : f32 to vector<16x16xf32>
    %152 = arith.mulf %151, %26 : vector<16x16xf32>
    %153 = arith.addf %149, %152 : vector<16x16xf32>
    %c1_50 = arith.constant 1 : index
    %c10_51 = arith.constant 10 : index
    %154 = memref.load %arg2[%c1_50, %c10_51] : memref<4x12xf32, #tpu.memory_space<smem>>
    %155 = vector.broadcast %154 : f32 to vector<16x16xf32>
    %156 = arith.mulf %155, %27 : vector<16x16xf32>
    %157 = arith.addf %153, %156 : vector<16x16xf32>
    %c1_52 = arith.constant 1 : index
    %c11_53 = arith.constant 11 : index
    %158 = memref.load %arg2[%c1_52, %c11_53] : memref<4x12xf32, #tpu.memory_space<smem>>
    %159 = vector.broadcast %158 : f32 to vector<16x16xf32>
    %160 = arith.mulf %159, %28 : vector<16x16xf32>
    %161 = arith.addf %157, %160 : vector<16x16xf32>
    %c1_54 = arith.constant 1 : index
    %162 = memref.load %arg3[%c1_54] : memref<4xf32, #tpu.memory_space<smem>>
    %163 = vector.broadcast %162 : f32 to vector<16x16xf32>
    %164 = arith.addf %161, %163 : vector<16x16xf32>
    %cst_55 = arith.constant 0.000000e+00 : f32
    %165 = vector.broadcast %cst_55 : f32 to vector<16x1xf32>
    %166 = tpu.concatenate %165, %164, %165 in 1 : vector<16x1xf32>, vector<16x16xf32>, vector<16x1xf32> -> vector<16x18xf32>
    %167 = vector.extract_strided_slice %166 {offsets = [0, 0], sizes = [16, 16], strides = [1, 1]} : vector<16x18xf32> to vector<16x16xf32>
    %168 = vector.extract_strided_slice %166 {offsets = [0, 1], sizes = [16, 16], strides = [1, 1]} : vector<16x18xf32> to vector<16x16xf32>
    %169 = vector.extract_strided_slice %166 {offsets = [0, 2], sizes = [16, 16], strides = [1, 1]} : vector<16x18xf32> to vector<16x16xf32>
    %cst_56 = arith.constant 0.000000e+00 : f32
    %170 = vector.broadcast %cst_56 : f32 to vector<16x64xf32>
    %171 = tpu.concatenate %167, %167, %167, %167 in 1 : vector<16x16xf32>, vector<16x16xf32>, vector<16x16xf32>, vector<16x16xf32> -> vector<16x64xf32>
    %172 = vector.extract_strided_slice %0 {offsets = [1, 0, 0, 0], sizes = [1, 1, 1, 64], strides = [1, 1, 1, 1]} : vector<4x3x1x64xf32> to vector<1x1x1x64xf32>
    %173 = vector.shape_cast %172 : vector<1x1x1x64xf32> to vector<1x64xf32>
    %174 = vector.broadcast %173 : vector<1x64xf32> to vector<16x64xf32>
    %175 = arith.mulf %174, %171 : vector<16x64xf32>
    %176 = arith.addf %170, %175 : vector<16x64xf32>
    %177 = tpu.concatenate %168, %168, %168, %168 in 1 : vector<16x16xf32>, vector<16x16xf32>, vector<16x16xf32>, vector<16x16xf32> -> vector<16x64xf32>
    %178 = vector.extract_strided_slice %0 {offsets = [1, 1, 0, 0], sizes = [1, 1, 1, 64], strides = [1, 1, 1, 1]} : vector<4x3x1x64xf32> to vector<1x1x1x64xf32>
    %179 = vector.shape_cast %178 : vector<1x1x1x64xf32> to vector<1x64xf32>
    %180 = vector.broadcast %179 : vector<1x64xf32> to vector<16x64xf32>
    %181 = arith.mulf %180, %177 : vector<16x64xf32>
    %182 = arith.addf %176, %181 : vector<16x64xf32>
    %183 = tpu.concatenate %169, %169, %169, %169 in 1 : vector<16x16xf32>, vector<16x16xf32>, vector<16x16xf32>, vector<16x16xf32> -> vector<16x64xf32>
    %184 = vector.extract_strided_slice %0 {offsets = [1, 2, 0, 0], sizes = [1, 1, 1, 64], strides = [1, 1, 1, 1]} : vector<4x3x1x64xf32> to vector<1x1x1x64xf32>
    %185 = vector.shape_cast %184 : vector<1x1x1x64xf32> to vector<1x64xf32>
    %186 = vector.broadcast %185 : vector<1x64xf32> to vector<16x64xf32>
    %187 = arith.mulf %186, %183 : vector<16x64xf32>
    %188 = arith.addf %182, %187 : vector<16x64xf32>
    %189 = vector.extract_strided_slice %1 {offsets = [1, 0, 0], sizes = [1, 1, 64], strides = [1, 1, 1]} : vector<4x1x64xf32> to vector<1x1x64xf32>
    %190 = vector.shape_cast %189 : vector<1x1x64xf32> to vector<1x64xf32>
    %191 = vector.broadcast %190 : vector<1x64xf32> to vector<16x64xf32>
    %192 = arith.addf %188, %191 : vector<16x64xf32>
    %cst_57 = arith.constant 0.000000e+00 : f32
    %cst_58 = arith.constant 6.000000e+00 : f32
    %193 = vector.broadcast %cst_57 : f32 to vector<16x64xf32>
    %194 = arith.maximumf %193, %192 : vector<16x64xf32>
    %195 = vector.broadcast %cst_58 : f32 to vector<16x64xf32>
    %196 = arith.minimumf %195, %194 : vector<16x64xf32>
    %cst_59 = arith.constant 0.000000e+00 : f32
    %197 = vector.broadcast %cst_59 : f32 to vector<16x16xf32>
    %c2_60 = arith.constant 2 : index
    %c0_61 = arith.constant 0 : index
    %198 = memref.load %arg2[%c2_60, %c0_61] : memref<4x12xf32, #tpu.memory_space<smem>>
    %199 = vector.broadcast %198 : f32 to vector<16x16xf32>
    %200 = arith.mulf %199, %8 : vector<16x16xf32>
    %201 = arith.addf %197, %200 : vector<16x16xf32>
    %c2_62 = arith.constant 2 : index
    %c1_63 = arith.constant 1 : index
    %202 = memref.load %arg2[%c2_62, %c1_63] : memref<4x12xf32, #tpu.memory_space<smem>>
    %203 = vector.broadcast %202 : f32 to vector<16x16xf32>
    %204 = arith.mulf %203, %9 : vector<16x16xf32>
    %205 = arith.addf %201, %204 : vector<16x16xf32>
    %c2_64 = arith.constant 2 : index
    %c2_65 = arith.constant 2 : index
    %206 = memref.load %arg2[%c2_64, %c2_65] : memref<4x12xf32, #tpu.memory_space<smem>>
    %207 = vector.broadcast %206 : f32 to vector<16x16xf32>
    %208 = arith.mulf %207, %10 : vector<16x16xf32>
    %209 = arith.addf %205, %208 : vector<16x16xf32>
    %c2_66 = arith.constant 2 : index
    %c3_67 = arith.constant 3 : index
    %210 = memref.load %arg2[%c2_66, %c3_67] : memref<4x12xf32, #tpu.memory_space<smem>>
    %211 = vector.broadcast %210 : f32 to vector<16x16xf32>
    %212 = arith.mulf %211, %14 : vector<16x16xf32>
    %213 = arith.addf %209, %212 : vector<16x16xf32>
    %c2_68 = arith.constant 2 : index
    %c4_69 = arith.constant 4 : index
    %214 = memref.load %arg2[%c2_68, %c4_69] : memref<4x12xf32, #tpu.memory_space<smem>>
    %215 = vector.broadcast %214 : f32 to vector<16x16xf32>
    %216 = arith.mulf %215, %15 : vector<16x16xf32>
    %217 = arith.addf %213, %216 : vector<16x16xf32>
    %c2_70 = arith.constant 2 : index
    %c5_71 = arith.constant 5 : index
    %218 = memref.load %arg2[%c2_70, %c5_71] : memref<4x12xf32, #tpu.memory_space<smem>>
    %219 = vector.broadcast %218 : f32 to vector<16x16xf32>
    %220 = arith.mulf %219, %16 : vector<16x16xf32>
    %221 = arith.addf %217, %220 : vector<16x16xf32>
    %c2_72 = arith.constant 2 : index
    %c6_73 = arith.constant 6 : index
    %222 = memref.load %arg2[%c2_72, %c6_73] : memref<4x12xf32, #tpu.memory_space<smem>>
    %223 = vector.broadcast %222 : f32 to vector<16x16xf32>
    %224 = arith.mulf %223, %20 : vector<16x16xf32>
    %225 = arith.addf %221, %224 : vector<16x16xf32>
    %c2_74 = arith.constant 2 : index
    %c7_75 = arith.constant 7 : index
    %226 = memref.load %arg2[%c2_74, %c7_75] : memref<4x12xf32, #tpu.memory_space<smem>>
    %227 = vector.broadcast %226 : f32 to vector<16x16xf32>
    %228 = arith.mulf %227, %21 : vector<16x16xf32>
    %229 = arith.addf %225, %228 : vector<16x16xf32>
    %c2_76 = arith.constant 2 : index
    %c8_77 = arith.constant 8 : index
    %230 = memref.load %arg2[%c2_76, %c8_77] : memref<4x12xf32, #tpu.memory_space<smem>>
    %231 = vector.broadcast %230 : f32 to vector<16x16xf32>
    %232 = arith.mulf %231, %22 : vector<16x16xf32>
    %233 = arith.addf %229, %232 : vector<16x16xf32>
    %c2_78 = arith.constant 2 : index
    %c9_79 = arith.constant 9 : index
    %234 = memref.load %arg2[%c2_78, %c9_79] : memref<4x12xf32, #tpu.memory_space<smem>>
    %235 = vector.broadcast %234 : f32 to vector<16x16xf32>
    %236 = arith.mulf %235, %26 : vector<16x16xf32>
    %237 = arith.addf %233, %236 : vector<16x16xf32>
    %c2_80 = arith.constant 2 : index
    %c10_81 = arith.constant 10 : index
    %238 = memref.load %arg2[%c2_80, %c10_81] : memref<4x12xf32, #tpu.memory_space<smem>>
    %239 = vector.broadcast %238 : f32 to vector<16x16xf32>
    %240 = arith.mulf %239, %27 : vector<16x16xf32>
    %241 = arith.addf %237, %240 : vector<16x16xf32>
    %c2_82 = arith.constant 2 : index
    %c11_83 = arith.constant 11 : index
    %242 = memref.load %arg2[%c2_82, %c11_83] : memref<4x12xf32, #tpu.memory_space<smem>>
    %243 = vector.broadcast %242 : f32 to vector<16x16xf32>
    %244 = arith.mulf %243, %28 : vector<16x16xf32>
    %245 = arith.addf %241, %244 : vector<16x16xf32>
    %c2_84 = arith.constant 2 : index
    %246 = memref.load %arg3[%c2_84] : memref<4xf32, #tpu.memory_space<smem>>
    %247 = vector.broadcast %246 : f32 to vector<16x16xf32>
    %248 = arith.addf %245, %247 : vector<16x16xf32>
    %cst_85 = arith.constant 0.000000e+00 : f32
    %249 = vector.broadcast %cst_85 : f32 to vector<16x1xf32>
    %250 = tpu.concatenate %249, %248, %249 in 1 : vector<16x1xf32>, vector<16x16xf32>, vector<16x1xf32> -> vector<16x18xf32>
    %251 = vector.extract_strided_slice %250 {offsets = [0, 0], sizes = [16, 16], strides = [1, 1]} : vector<16x18xf32> to vector<16x16xf32>
    %252 = vector.extract_strided_slice %250 {offsets = [0, 1], sizes = [16, 16], strides = [1, 1]} : vector<16x18xf32> to vector<16x16xf32>
    %253 = vector.extract_strided_slice %250 {offsets = [0, 2], sizes = [16, 16], strides = [1, 1]} : vector<16x18xf32> to vector<16x16xf32>
    %cst_86 = arith.constant 0.000000e+00 : f32
    %254 = vector.broadcast %cst_86 : f32 to vector<16x64xf32>
    %255 = tpu.concatenate %251, %251, %251, %251 in 1 : vector<16x16xf32>, vector<16x16xf32>, vector<16x16xf32>, vector<16x16xf32> -> vector<16x64xf32>
    %256 = vector.extract_strided_slice %0 {offsets = [2, 0, 0, 0], sizes = [1, 1, 1, 64], strides = [1, 1, 1, 1]} : vector<4x3x1x64xf32> to vector<1x1x1x64xf32>
    %257 = vector.shape_cast %256 : vector<1x1x1x64xf32> to vector<1x64xf32>
    %258 = vector.broadcast %257 : vector<1x64xf32> to vector<16x64xf32>
    %259 = arith.mulf %258, %255 : vector<16x64xf32>
    %260 = arith.addf %254, %259 : vector<16x64xf32>
    %261 = tpu.concatenate %252, %252, %252, %252 in 1 : vector<16x16xf32>, vector<16x16xf32>, vector<16x16xf32>, vector<16x16xf32> -> vector<16x64xf32>
    %262 = vector.extract_strided_slice %0 {offsets = [2, 1, 0, 0], sizes = [1, 1, 1, 64], strides = [1, 1, 1, 1]} : vector<4x3x1x64xf32> to vector<1x1x1x64xf32>
    %263 = vector.shape_cast %262 : vector<1x1x1x64xf32> to vector<1x64xf32>
    %264 = vector.broadcast %263 : vector<1x64xf32> to vector<16x64xf32>
    %265 = arith.mulf %264, %261 : vector<16x64xf32>
    %266 = arith.addf %260, %265 : vector<16x64xf32>
    %267 = tpu.concatenate %253, %253, %253, %253 in 1 : vector<16x16xf32>, vector<16x16xf32>, vector<16x16xf32>, vector<16x16xf32> -> vector<16x64xf32>
    %268 = vector.extract_strided_slice %0 {offsets = [2, 2, 0, 0], sizes = [1, 1, 1, 64], strides = [1, 1, 1, 1]} : vector<4x3x1x64xf32> to vector<1x1x1x64xf32>
    %269 = vector.shape_cast %268 : vector<1x1x1x64xf32> to vector<1x64xf32>
    %270 = vector.broadcast %269 : vector<1x64xf32> to vector<16x64xf32>
    %271 = arith.mulf %270, %267 : vector<16x64xf32>
    %272 = arith.addf %266, %271 : vector<16x64xf32>
    %273 = vector.extract_strided_slice %1 {offsets = [2, 0, 0], sizes = [1, 1, 64], strides = [1, 1, 1]} : vector<4x1x64xf32> to vector<1x1x64xf32>
    %274 = vector.shape_cast %273 : vector<1x1x64xf32> to vector<1x64xf32>
    %275 = vector.broadcast %274 : vector<1x64xf32> to vector<16x64xf32>
    %276 = arith.addf %272, %275 : vector<16x64xf32>
    %cst_87 = arith.constant 0.000000e+00 : f32
    %cst_88 = arith.constant 6.000000e+00 : f32
    %277 = vector.broadcast %cst_87 : f32 to vector<16x64xf32>
    %278 = arith.maximumf %277, %276 : vector<16x64xf32>
    %279 = vector.broadcast %cst_88 : f32 to vector<16x64xf32>
    %280 = arith.minimumf %279, %278 : vector<16x64xf32>
    %cst_89 = arith.constant 0.000000e+00 : f32
    %281 = vector.broadcast %cst_89 : f32 to vector<16x16xf32>
    %c3_90 = arith.constant 3 : index
    %c0_91 = arith.constant 0 : index
    %282 = memref.load %arg2[%c3_90, %c0_91] : memref<4x12xf32, #tpu.memory_space<smem>>
    %283 = vector.broadcast %282 : f32 to vector<16x16xf32>
    %284 = arith.mulf %283, %8 : vector<16x16xf32>
    %285 = arith.addf %281, %284 : vector<16x16xf32>
    %c3_92 = arith.constant 3 : index
    %c1_93 = arith.constant 1 : index
    %286 = memref.load %arg2[%c3_92, %c1_93] : memref<4x12xf32, #tpu.memory_space<smem>>
    %287 = vector.broadcast %286 : f32 to vector<16x16xf32>
    %288 = arith.mulf %287, %9 : vector<16x16xf32>
    %289 = arith.addf %285, %288 : vector<16x16xf32>
    %c3_94 = arith.constant 3 : index
    %c2_95 = arith.constant 2 : index
    %290 = memref.load %arg2[%c3_94, %c2_95] : memref<4x12xf32, #tpu.memory_space<smem>>
    %291 = vector.broadcast %290 : f32 to vector<16x16xf32>
    %292 = arith.mulf %291, %10 : vector<16x16xf32>
    %293 = arith.addf %289, %292 : vector<16x16xf32>
    %c3_96 = arith.constant 3 : index
    %c3_97 = arith.constant 3 : index
    %294 = memref.load %arg2[%c3_96, %c3_97] : memref<4x12xf32, #tpu.memory_space<smem>>
    %295 = vector.broadcast %294 : f32 to vector<16x16xf32>
    %296 = arith.mulf %295, %14 : vector<16x16xf32>
    %297 = arith.addf %293, %296 : vector<16x16xf32>
    %c3_98 = arith.constant 3 : index
    %c4_99 = arith.constant 4 : index
    %298 = memref.load %arg2[%c3_98, %c4_99] : memref<4x12xf32, #tpu.memory_space<smem>>
    %299 = vector.broadcast %298 : f32 to vector<16x16xf32>
    %300 = arith.mulf %299, %15 : vector<16x16xf32>
    %301 = arith.addf %297, %300 : vector<16x16xf32>
    %c3_100 = arith.constant 3 : index
    %c5_101 = arith.constant 5 : index
    %302 = memref.load %arg2[%c3_100, %c5_101] : memref<4x12xf32, #tpu.memory_space<smem>>
    %303 = vector.broadcast %302 : f32 to vector<16x16xf32>
    %304 = arith.mulf %303, %16 : vector<16x16xf32>
    %305 = arith.addf %301, %304 : vector<16x16xf32>
    %c3_102 = arith.constant 3 : index
    %c6_103 = arith.constant 6 : index
    %306 = memref.load %arg2[%c3_102, %c6_103] : memref<4x12xf32, #tpu.memory_space<smem>>
    %307 = vector.broadcast %306 : f32 to vector<16x16xf32>
    %308 = arith.mulf %307, %20 : vector<16x16xf32>
    %309 = arith.addf %305, %308 : vector<16x16xf32>
    %c3_104 = arith.constant 3 : index
    %c7_105 = arith.constant 7 : index
    %310 = memref.load %arg2[%c3_104, %c7_105] : memref<4x12xf32, #tpu.memory_space<smem>>
    %311 = vector.broadcast %310 : f32 to vector<16x16xf32>
    %312 = arith.mulf %311, %21 : vector<16x16xf32>
    %313 = arith.addf %309, %312 : vector<16x16xf32>
    %c3_106 = arith.constant 3 : index
    %c8_107 = arith.constant 8 : index
    %314 = memref.load %arg2[%c3_106, %c8_107] : memref<4x12xf32, #tpu.memory_space<smem>>
    %315 = vector.broadcast %314 : f32 to vector<16x16xf32>
    %316 = arith.mulf %315, %22 : vector<16x16xf32>
    %317 = arith.addf %313, %316 : vector<16x16xf32>
    %c3_108 = arith.constant 3 : index
    %c9_109 = arith.constant 9 : index
    %318 = memref.load %arg2[%c3_108, %c9_109] : memref<4x12xf32, #tpu.memory_space<smem>>
    %319 = vector.broadcast %318 : f32 to vector<16x16xf32>
    %320 = arith.mulf %319, %26 : vector<16x16xf32>
    %321 = arith.addf %317, %320 : vector<16x16xf32>
    %c3_110 = arith.constant 3 : index
    %c10_111 = arith.constant 10 : index
    %322 = memref.load %arg2[%c3_110, %c10_111] : memref<4x12xf32, #tpu.memory_space<smem>>
    %323 = vector.broadcast %322 : f32 to vector<16x16xf32>
    %324 = arith.mulf %323, %27 : vector<16x16xf32>
    %325 = arith.addf %321, %324 : vector<16x16xf32>
    %c3_112 = arith.constant 3 : index
    %c11_113 = arith.constant 11 : index
    %326 = memref.load %arg2[%c3_112, %c11_113] : memref<4x12xf32, #tpu.memory_space<smem>>
    %327 = vector.broadcast %326 : f32 to vector<16x16xf32>
    %328 = arith.mulf %327, %28 : vector<16x16xf32>
    %329 = arith.addf %325, %328 : vector<16x16xf32>
    %c3_114 = arith.constant 3 : index
    %330 = memref.load %arg3[%c3_114] : memref<4xf32, #tpu.memory_space<smem>>
    %331 = vector.broadcast %330 : f32 to vector<16x16xf32>
    %332 = arith.addf %329, %331 : vector<16x16xf32>
    %cst_115 = arith.constant 0.000000e+00 : f32
    %333 = vector.broadcast %cst_115 : f32 to vector<16x1xf32>
    %334 = tpu.concatenate %333, %332, %333 in 1 : vector<16x1xf32>, vector<16x16xf32>, vector<16x1xf32> -> vector<16x18xf32>
    %335 = vector.extract_strided_slice %334 {offsets = [0, 0], sizes = [16, 16], strides = [1, 1]} : vector<16x18xf32> to vector<16x16xf32>
    %336 = vector.extract_strided_slice %334 {offsets = [0, 1], sizes = [16, 16], strides = [1, 1]} : vector<16x18xf32> to vector<16x16xf32>
    %337 = vector.extract_strided_slice %334 {offsets = [0, 2], sizes = [16, 16], strides = [1, 1]} : vector<16x18xf32> to vector<16x16xf32>
    %cst_116 = arith.constant 0.000000e+00 : f32
    %338 = vector.broadcast %cst_116 : f32 to vector<16x64xf32>
    %339 = tpu.concatenate %335, %335, %335, %335 in 1 : vector<16x16xf32>, vector<16x16xf32>, vector<16x16xf32>, vector<16x16xf32> -> vector<16x64xf32>
    %340 = vector.extract_strided_slice %0 {offsets = [3, 0, 0, 0], sizes = [1, 1, 1, 64], strides = [1, 1, 1, 1]} : vector<4x3x1x64xf32> to vector<1x1x1x64xf32>
    %341 = vector.shape_cast %340 : vector<1x1x1x64xf32> to vector<1x64xf32>
    %342 = vector.broadcast %341 : vector<1x64xf32> to vector<16x64xf32>
    %343 = arith.mulf %342, %339 : vector<16x64xf32>
    %344 = arith.addf %338, %343 : vector<16x64xf32>
    %345 = tpu.concatenate %336, %336, %336, %336 in 1 : vector<16x16xf32>, vector<16x16xf32>, vector<16x16xf32>, vector<16x16xf32> -> vector<16x64xf32>
    %346 = vector.extract_strided_slice %0 {offsets = [3, 1, 0, 0], sizes = [1, 1, 1, 64], strides = [1, 1, 1, 1]} : vector<4x3x1x64xf32> to vector<1x1x1x64xf32>
    %347 = vector.shape_cast %346 : vector<1x1x1x64xf32> to vector<1x64xf32>
    %348 = vector.broadcast %347 : vector<1x64xf32> to vector<16x64xf32>
    %349 = arith.mulf %348, %345 : vector<16x64xf32>
    %350 = arith.addf %344, %349 : vector<16x64xf32>
    %351 = tpu.concatenate %337, %337, %337, %337 in 1 : vector<16x16xf32>, vector<16x16xf32>, vector<16x16xf32>, vector<16x16xf32> -> vector<16x64xf32>
    %352 = vector.extract_strided_slice %0 {offsets = [3, 2, 0, 0], sizes = [1, 1, 1, 64], strides = [1, 1, 1, 1]} : vector<4x3x1x64xf32> to vector<1x1x1x64xf32>
    %353 = vector.shape_cast %352 : vector<1x1x1x64xf32> to vector<1x64xf32>
    %354 = vector.broadcast %353 : vector<1x64xf32> to vector<16x64xf32>
    %355 = arith.mulf %354, %351 : vector<16x64xf32>
    %356 = arith.addf %350, %355 : vector<16x64xf32>
    %357 = vector.extract_strided_slice %1 {offsets = [3, 0, 0], sizes = [1, 1, 64], strides = [1, 1, 1]} : vector<4x1x64xf32> to vector<1x1x64xf32>
    %358 = vector.shape_cast %357 : vector<1x1x64xf32> to vector<1x64xf32>
    %359 = vector.broadcast %358 : vector<1x64xf32> to vector<16x64xf32>
    %360 = arith.addf %356, %359 : vector<16x64xf32>
    %cst_117 = arith.constant 0.000000e+00 : f32
    %cst_118 = arith.constant 6.000000e+00 : f32
    %361 = vector.broadcast %cst_117 : f32 to vector<16x64xf32>
    %362 = arith.maximumf %361, %360 : vector<16x64xf32>
    %363 = vector.broadcast %cst_118 : f32 to vector<16x64xf32>
    %364 = arith.minimumf %363, %362 : vector<16x64xf32>
    %365 = tpu.concatenate %112, %196, %280, %364 in 1 : vector<16x64xf32>, vector<16x64xf32>, vector<16x64xf32>, vector<16x64xf32> -> vector<16x256xf32>
    %c0_119 = arith.constant 0 : index
    %c0_120 = arith.constant 0 : index
    %c0_121 = arith.constant 0 : index
    %366 = vector.load %arg6[%c0_119, %c0_120, %c0_121] : memref<1x16x256xf32, #tpu.memory_space<vmem>>, vector<1x16x256xf32>
    %367 = vector.shape_cast %366 : vector<1x16x256xf32> to vector<16x256xf32>
    %368 = vector.shape_cast %365 : vector<16x256xf32> to vector<1x16x256xf32>
    tpu.vector_store %arg6[%c0_119, %c0_120, %c0_121], %368 {strides = array<i32>} : memref<1x16x256xf32, #tpu.memory_space<vmem>>, vector<1x16x256xf32>,
    return
  }
  func.func @transform_0(%arg0: i32) -> (i32, i32, i32, i32) {
    %c0_i32 = arith.constant 0 : i32
    %c0_i32_0 = arith.constant 0 : i32
    %c0_i32_1 = arith.constant 0 : i32
    %c0_i32_2 = arith.constant 0 : i32
    return %arg0, %c0_i32, %c0_i32_0, %c0_i32_1 : i32, i32, i32, i32
  }
  func.func @transform_1(%arg0: i32) -> (i32, i32) {
    %c0_i32 = arith.constant 0 : i32
    %c0_i32_0 = arith.constant 0 : i32
    %c0_i32_1 = arith.constant 0 : i32
    return %c0_i32, %c0_i32_0 : i32, i32
  }
  func.func @transform_2(%arg0: i32) -> i32 {
    %c0_i32 = arith.constant 0 : i32
    %c0_i32_0 = arith.constant 0 : i32
    return %c0_i32 : i32
  }
  func.func @transform_3(%arg0: i32) -> (i32, i32, i32, i32) {
    %c0_i32 = arith.constant 0 : i32
    %c0_i32_0 = arith.constant 0 : i32
    %c0_i32_1 = arith.constant 0 : i32
    %c0_i32_2 = arith.constant 0 : i32
    %c0_i32_3 = arith.constant 0 : i32
    return %c0_i32, %c0_i32_0, %c0_i32_1, %c0_i32_2 : i32, i32, i32, i32
  }
  func.func @transform_4(%arg0: i32) -> (i32, i32, i32) {
    %c0_i32 = arith.constant 0 : i32
    %c0_i32_0 = arith.constant 0 : i32
    %c0_i32_1 = arith.constant 0 : i32
    %c0_i32_2 = arith.constant 0 : i32
    return %c0_i32, %c0_i32_0, %c0_i32_1 : i32, i32, i32
  }
  func.func @transform_5(%arg0: i32) -> (i32, i32, i32) {
    %c0_i32 = arith.constant 0 : i32
    %c0_i32_0 = arith.constant 0 : i32
    %c0_i32_1 = arith.constant 0 : i32
    return %arg0, %c0_i32, %c0_i32_0 : i32, i32, i32
  }
}

</mosaic_0001>

<llo_original>
// kernel: stem_forward.1
$region0: #{stem_forward.1}
  #allocation0 [shape = 'u32[]', space=smem, size = 0x4, offset = 0x4, fixed_abs, tag = 'smem constant byte address 0x4 - core index']
  #allocation1 [shape = 'u32[144,128]{1,0:T(1,128)}', space=vmem, size = 0x12000, scoped, tag = 'internal scratch']
  %s0 = inlined_call_operand.vmem [shape: f32[2,4,16,16], index: 0, kind: input, shape index: {}]
  %s1 = inlined_call_operand.vmem [shape: f32[4,12], index: 1, kind: input, shape index: {}]
  %s2 = inlined_call_operand.vmem [shape: f32[4], index: 2, kind: input, shape index: {}]
  %s3 = inlined_call_operand.vmem [shape: f32[4,3,1,64], index: 3, kind: input, shape index: {}]
  %s4 = inlined_call_operand.vmem [shape: f32[4,1,64], index: 4, kind: input, shape index: {}]
  %s5 = inlined_call_operand.vmem [shape: f32[2,16,256], index: 5, kind: output, shape index: {}]
  %s6 = sld [smem:[#allocation0]]
  $region61: #{stem_forward.1} parent=0
    _
  %s8 = ssub.s32 1, %s6
  %s9 = scalar_select 0, %s8, %s6
  $region1: #{stem_forward.1} parent=0
    #allocation2 [shape = 'u8[2048]{0}', space=smem, size = 0x800, scoped, tag = 'input window, operand 1, single buffered']
    #allocation3 [shape = 's32[2]{0}', space=sflag, size = 0x8, scoped, tag = 'scoped memory for stem_forward.1']
    #allocation4 [shape = 'u8[512]{0}', space=smem, size = 0x200, scoped, tag = 'input window, operand 2, single buffered']
    #allocation5 [shape = 's32[1]{0}', space=sflag, size = 0x4, scoped, tag = 'scoped memory for stem_forward.1']
    %10 = vsyncpa [#allocation3], 0
    %11 = vsyncpa [#allocation5], 0
    loop: start=0, step=1, limit=4
    $region2: #{stem_forward.1} parent=1 // loop_pre_header
      _
    $region3: #{stem_forward.1} parent=1 // loop_header
      %s13 = sphi 0, %s17
      %p14 = scmp.ge.s32.totalorder %s13, 4
      %s23 = sphi 0, %s25
      %s26 = sphi 0, %s23
      %s27 = sphi 0, %s26
      %s43 = sphi 0, %s27
      %s47 = sphi 0, %s47
      %s49 = sphi 0, %s47
      %s50 = sphi 0, %s49
      %s64 = sphi 0, %s50
      %s68 = sphi 0, %s68
      %s70 = sphi 0, %s68
      %s71 = sphi 0, %s70
      %s85 = sphi 0, %s71
      %s89 = sphi 0, %s89
      %s91 = sphi 0, %s89
      %s92 = sphi 0, %s91
      %s106 = sphi 0, %s92
      %s110 = sphi 0, %s110
      %s112 = sphi 0, %s110
      %s113 = sphi 0, %s112
      %s127 = sphi 0, %s113
      %s133 = sphi 0, %s135
      %s136 = sphi 0, %s133
      %s137 = sphi 0, %s136
      %s153 = sphi 0, %s137
    $region4: #{stem_forward.1} parent=1 // loop_header_branch
      %16 = sbr.rel (%p14) target = $region8
    $region5: #{stem_forward.1} parent=1 // loop_body
      %s18 = ssub.s32 %s13, 1
      %s19 = ssub.s32 %s13, 2
      %s20 = sadd.s32 %s13, 1
      %s21 = ssub.s32 %s13, %s20
      %p22 = scmp.eq.s32.totalorder %s21, 0
      %s24 = sadd.s32 %s23, 1
      %s25 = scalar_select %p22, %s23, %s24
      %p28 = pneg %p22
      %p29 = scmp.eq.s32.totalorder %s13, 1
      %p30 = por %p28, %p29
      %p31 = scmp.ne.s32.totalorder %s23, %s26
      %p32 = scmp.eq.s32.totalorder %s13, 0
      %p33 = por %p31, %p32
      %p34 = scmp.ne.s32.totalorder %s23, %s26
      %p35 = scmp.eq.s32.totalorder %s18, 1
      %p36 = por %p34, %p35
      %p37 = scmp.ne.s32.totalorder %s26, %s27
      %p38 = scmp.eq.s32.totalorder %s18, 0
      %p39 = por %p37, %p38
      %p40 = scmp.ne.s32.totalorder %s26, %s27
      %p41 = scmp.eq.s32.totalorder %s19, 1
      %p42 = por %p40, %p41
      %p44 = scmp.ne.s32.totalorder %s27, %s43
      %p45 = scmp.eq.s32.totalorder %s19, 0
      %p46 = por %p44, %p45
      %s48 = sadd.s32 %s47, 1
      %p51 = scmp.eq.s32.totalorder %s13, 1
      %p52 = scmp.ne.s32.totalorder %s47, %s49
      %p53 = scmp.eq.s32.totalorder %s13, 0
      %p54 = por %p52, %p53
      %p55 = scmp.ne.s32.totalorder %s47, %s49
      %p56 = scmp.eq.s32.totalorder %s18, 1
      %p57 = por %p55, %p56
      %p58 = scmp.ne.s32.totalorder %s49, %s50
      %p59 = scmp.eq.s32.totalorder %s18, 0
      %p60 = por %p58, %p59
      %p61 = scmp.ne.s32.totalorder %s49, %s50
      %p62 = scmp.eq.s32.totalorder %s19, 1
      %p63 = por %p61, %p62
      %p65 = scmp.ne.s32.totalorder %s50, %s64
      %p66 = scmp.eq.s32.totalorder %s19, 0
      %p67 = por %p65, %p66
      %s69 = sadd.s32 %s68, 1
      %p72 = scmp.eq.s32.totalorder %s13, 1
      %p73 = scmp.ne.s32.totalorder %s68, %s70
      %p74 = scmp.eq.s32.totalorder %s13, 0
      %p75 = por %p73, %p74
      %p76 = scmp.ne.s32.totalorder %s68, %s70
      %p77 = scmp.eq.s32.totalorder %s18, 1
      %p78 = por %p76, %p77
      %p79 = scmp.ne.s32.totalorder %s70, %s71
      %p80 = scmp.eq.s32.totalorder %s18, 0
      %p81 = por %p79, %p80
      %p82 = scmp.ne.s32.totalorder %s70, %s71
      %p83 = scmp.eq.s32.totalorder %s19, 1
      %p84 = por %p82, %p83
      %p86 = scmp.ne.s32.totalorder %s71, %s85
      %p87 = scmp.eq.s32.totalorder %s19, 0
      %p88 = por %p86, %p87
      %s90 = sadd.s32 %s89, 1
      %p93 = scmp.eq.s32.totalorder %s13, 1
      %p94 = scmp.ne.s32.totalorder %s89, %s91
      %p95 = scmp.eq.s32.totalorder %s13, 0
      %p96 = por %p94, %p95
      %p97 = scmp.ne.s32.totalorder %s89, %s91
      %p98 = scmp.eq.s32.totalorder %s18, 1
      %p99 = por %p97, %p98
      %p100 = scmp.ne.s32.totalorder %s91, %s92
      %p101 = scmp.eq.s32.totalorder %s18, 0
      %p102 = por %p100, %p101
      %p103 = scmp.ne.s32.totalorder %s91, %s92
      %p104 = scmp.eq.s32.totalorder %s19, 1
      %p105 = por %p103, %p104
      %p107 = scmp.ne.s32.totalorder %s92, %s106
      %p108 = scmp.eq.s32.totalorder %s19, 0
      %p109 = por %p107, %p108
      %s111 = sadd.s32 %s110, 1
      %p114 = scmp.eq.s32.totalorder %s13, 1
      %p115 = scmp.ne.s32.totalorder %s110, %s112
      %p116 = scmp.eq.s32.totalorder %s13, 0
      %p117 = por %p115, %p116
      %p118 = scmp.ne.s32.totalorder %s110, %s112
      %p119 = scmp.eq.s32.totalorder %s18, 1
      %p120 = por %p118, %p119
      %p121 = scmp.ne.s32.totalorder %s112, %s113
      %p122 = scmp.eq.s32.totalorder %s18, 0
      %p123 = por %p121, %p122
      %p124 = scmp.ne.s32.totalorder %s112, %s113
      %p125 = scmp.eq.s32.totalorder %s19, 1
      %p126 = por %p124, %p125
      %p128 = scmp.ne.s32.totalorder %s113, %s127
      %p129 = scmp.eq.s32.totalorder %s19, 0
      %p130 = por %p128, %p129
      %s131 = ssub.s32 %s13, %s20
      %p132 = scmp.eq.s32.totalorder %s131, 0
      %s134 = sadd.s32 %s133, 1
      %s135 = scalar_select %p132, %s133, %s134
      %p138 = pneg %p132
      %p139 = scmp.eq.s32.totalorder %s13, 1
      %p140 = por %p138, %p139
      %p141 = scmp.ne.s32.totalorder %s133, %s136
      %p142 = scmp.eq.s32.totalorder %s13, 0
      %p143 = por %p141, %p142
      %p144 = scmp.ne.s32.totalorder %s133, %s136
      %p145 = scmp.eq.s32.totalorder %s18, 1
      %p146 = por %p144, %p145
      %p147 = scmp.ne.s32.totalorder %s136, %s137
      %p148 = scmp.eq.s32.totalorder %s18, 0
      %p149 = por %p147, %p148
      %p150 = scmp.ne.s32.totalorder %s136, %s137
      %p151 = scmp.eq.s32.totalorder %s19, 1
      %p152 = por %p150, %p151
      %p154 = scmp.ne.s32.totalorder %s137, %s153
      %p155 = scmp.eq.s32.totalorder %s19, 0
      %p156 = por %p154, %p155
      %p157 = scmp.le.s32.totalorder 1, %s13
      %p158 = scmp.lt.s32.totalorder %s13, 3
      %p159 = pnand %p157, %p158
      %p160 = pneg %p159
      // Predicated region
      $region9: #{stem_forward.1} parent=5 // pred_check
        _
      $region10: #{stem_forward.1} parent=5 // pred_check_branch
        %162 = sbr.rel (%p159) target = $region12
      $region11: #{stem_forward.1} parent=5 // pred_region
        %s163 = ssub.s32 %s13, 1
        // Predicated region
        $region13: #{stem_forward.1} parent=11 // pred_check
          %p164 = pneg %p60
        $region14: #{stem_forward.1} parent=11 // pred_check_branch
          %166 = sbr.rel (%p164) target = $region16
        $region15: #{stem_forward.1} parent=11 // pred_region
          %s168 = ssub.s32 64, 64
          %169 = vsyncadd [#allocation3], %s168
          %s171 = sshll.u32 %s1, 4
          %s172 = int_to_ptr.vmem [resolvable:$true] %s171
          %174 = dma.vmem_to_smem %s172, 64, [#allocation2], [#allocation3]
        $region16: #{stem_forward.1} parent=11 // pred_fallthru
          _
        // Predicated region
        $region17: #{stem_forward.1} parent=11 // pred_check
          %p175 = pneg %p81
        $region18: #{stem_forward.1} parent=11 // pred_check_branch
          %177 = sbr.rel (%p175) target = $region20
        $region19: #{stem_forward.1} parent=11 // pred_region
          %s179 = ssub.s32 16, 16
          %180 = vsyncadd [#allocation5], %s179
          %s182 = sshll.u32 %s2, 4
          %s183 = int_to_ptr.vmem [resolvable:$true] %s182
          %185 = dma.vmem_to_smem %s183, 16, [#allocation4], [#allocation5]
        $region20: #{stem_forward.1} parent=11 // pred_fallthru
          _
        // Predicated region
        $region21: #{stem_forward.1} parent=11 // pred_check
          %p186 = pneg %p102
        $region22: #{stem_forward.1} parent=11 // pred_check_branch
          %188 = sbr.rel (%p186) target = $region24
        $region23: #{stem_forward.1} parent=11 // pred_region
          _
        $region24: #{stem_forward.1} parent=11 // pred_fallthru
          _
        // Predicated region
        $region25: #{stem_forward.1} parent=11 // pred_check
          %p189 = pneg %p123
        $region26: #{stem_forward.1} parent=11 // pred_check_branch
          %191 = sbr.rel (%p189) target = $region28
        $region27: #{stem_forward.1} parent=11 // pred_region
          _
        $region28: #{stem_forward.1} parent=11 // pred_fallthru
          _
      $region12: #{stem_forward.1} parent=5 // pred_fallthru
        _
      %p192 = scmp.lt.s32.totalorder %s13, 2
      // Predicated region
      $region29: #{stem_forward.1} parent=5 // pred_check
        %p193 = pneg %p192
      $region30: #{stem_forward.1} parent=5 // pred_check_branch
        %195 = sbr.rel (%p193) target = $region32
      $region31: #{stem_forward.1} parent=5 // pred_region
        // Predicated region
        $region33: #{stem_forward.1} parent=31 // pred_check
          %p196 = pneg %p33
        $region34: #{stem_forward.1} parent=31 // pred_check_branch
          %198 = sbr.rel (%p196) target = $region36
        $region35: #{stem_forward.1} parent=31 // pred_region
          %p199 = scmp.lt.s32.totalorder %s13, 1
          %s200 = scalar_select %p199, %s13, 1
          %s201 = smul.addr %s200, 8
          %s202 = smul.addr %s201, 8
          %s203 = scalar_lea.vmem %s0, %s202
        $region36: #{stem_forward.1} parent=31 // pred_fallthru
          _
      $region32: #{stem_forward.1} parent=5 // pred_fallthru
        _
      %p204 = scmp.le.s32.totalorder 1, %s13
      %p205 = scmp.lt.s32.totalorder %s13, 3
      %p206 = pnand %p204, %p205
      %p207 = pneg %p206
      // Predicated region
      $region37: #{stem_forward.1} parent=5 // pred_check
        _
      $region38: #{stem_forward.1} parent=5 // pred_check_branch
        %209 = sbr.rel (%p206) target = $region40
      $region39: #{stem_forward.1} parent=5 // pred_region
        %s210 = ssub.s32 %s13, 1
        // Predicated region
        $region41: #{stem_forward.1} parent=39 // pred_check
          %p211 = pneg %p60
        $region42: #{stem_forward.1} parent=39 // pred_check_branch
          %213 = sbr.rel (%p211) target = $region44
        $region43: #{stem_forward.1} parent=39 // pred_region
          %214 = dma.done [#allocation3], 64
        $region44: #{stem_forward.1} parent=39 // pred_fallthru
          _
        // Predicated region
        $region45: #{stem_forward.1} parent=39 // pred_check
          %p215 = pneg %p81
        $region46: #{stem_forward.1} parent=39 // pred_check_branch
          %217 = sbr.rel (%p215) target = $region48
        $region47: #{stem_forward.1} parent=39 // pred_region
          %218 = dma.done [#allocation5], 16
        $region48: #{stem_forward.1} parent=39 // pred_fallthru
          _
        %219 = sfence
        %p220 = scmp.lt.s32.totalorder %s18, 1
        %s221 = scalar_select %p220, %s18, 1
        %s222 = smul.addr %s221, 8
        %s223 = smul.addr %s222, 8
        %s224 = scalar_lea.vmem %s0, %s223
        %p225 = pneg %p39
        %p226 = pneg %p36
        %p227 = pneg %p60
        %p228 = pneg %p57
        %p229 = pneg %p81
        %p230 = pneg %p78
        %p231 = pneg %p102
        %p232 = pneg %p99
        %p233 = pneg %p123
        %p234 = pneg %p120
        %p235 = pneg %p149
        %p236 = pneg %p146
        %p237 = scmp.lt.s32.totalorder %s18, 1
        %s238 = scalar_select %p237, %s18, 1
        %s239 = smul.addr %s238, 4
        %s240 = smul.addr %s239, 8
        %s241 = scalar_lea.vmem %s5, %s240
        %p242 = scmp.lt.s32.totalorder %s18, 1
        %s243 = scalar_select %p242, %s18, 1
        %s244 = smul.addr %s243, 8
        %s245 = smul.addr %s244, 8
        %s246 = scalar_lea.vmem %s0, %s245
        %p247 = scmp.lt.s32.totalorder %s18, 1
        %s248 = scalar_select %p247, %s18, 1
        %s249 = smul.addr %s248, 4
        %s250 = smul.addr %s249, 8
        %s251 = scalar_lea.vmem %s5, %s250
        %v252 = vld [vmem:[%s3] sm:$0x1]
        %v253 = vld [vmem:[%s3 + $0x1] sm:$0x1]
        %v254 = vld [vmem:[%s3 + $0x2] sm:$0x1]
        %v255 = vld [vmem:[%s3 + $0x3] sm:$0x1]
        %v256 = vld [vmem:[%s3 + $0x4] sm:$0x1]
        %v257 = vld [vmem:[%s3 + $0x5] sm:$0x1]
        %v258 = vld [vmem:[%s3 + $0x6] sm:$0x1]
        %v259 = vld [vmem:[%s3 + $0x7] sm:$0x1]
        %v260 = vld [vmem:[%s3 + $0x8] sm:$0x1]
        %v261 = vld [vmem:[%s3 + $0x9] sm:$0x1]
        %v262 = vld [vmem:[%s3 + $0xa] sm:$0x1]
        %v263 = vld [vmem:[%s3 + $0xb] sm:$0x1]
        %v264 = vld [vmem:[%s4] sm:$0x1]
        %v265 = vld [vmem:[%s4 + $0x1] sm:$0x1]
        %v266 = vld [vmem:[%s4 + $0x2] sm:$0x1]
        %v267 = vld [vmem:[%s4 + $0x3] sm:$0x1]
        %v268 = vld [vmem:[%s246] sm:$0xff]
        %v269 = vld [vmem:[%s246 + $0x8] sm:$0xff]
        %v270 = vld [vmem:[%s246 + $0x10] sm:$0xff]
        %v271 = vld [vmem:[%s246 + $0x18] sm:$0xff]
        %v272 = vld [vmem:[%s246 + $0x20] sm:$0xff]
        %v273 = vld [vmem:[%s246 + $0x28] sm:$0xff]
        %v274 = vld [vmem:[%s246 + $0x30] sm:$0xff]
        %v275 = vld [vmem:[%s246 + $0x38] sm:$0xff]
        %vm278 = vcmask 1040384
        %v279 = vrot.slane %v268, 7
        %v280 = vrot.slane %v269, 7
        %v281 = vsel %vm278, %v279, %v280
        %v285 = vsel %vm278, 0.0, %v279
        %v286 = vsel %vm278, %v280, 0.0
        %v289 = vrot.slane %v270, 7
        %v290 = vrot.slane %v271, 7
        %v291 = vsel %vm278, %v289, %v290
        %v295 = vsel %vm278, 0.0, %v289
        %v296 = vsel %vm278, %v290, 0.0
        %v299 = vrot.slane %v272, 7
        %v300 = vrot.slane %v273, 7
        %v301 = vsel %vm278, %v299, %v300
        %v305 = vsel %vm278, 0.0, %v299
        %v306 = vsel %vm278, %v300, 0.0
        %v309 = vrot.slane %v274, 7
        %v310 = vrot.slane %v275, 7
        %v311 = vsel %vm278, %v309, %v310
        %v315 = vsel %vm278, 0.0, %v309
        %v316 = vsel %vm278, %v310, 0.0
        %s317 = sld [smem:[#allocation2]]
        %v318 = vstv %s317
        %v319 = vmul.f32 %v318, %v285
        %v320 = vmul.f32 %v318, %v281
        %v321 = vadd.f32 %v319, 0.0
        %v322 = vadd.f32 %v320, 0.0
        %s323 = sld [smem:[#allocation2 + $0x1]]
        %v324 = vstv %s323
        %v325 = vmul.f32 %v324, %v285
        %v326 = vmul.f32 %v324, %v281
        %v327 = vmul.f32 %v324, %v286
        %vm331 = vcmask 1046528
        %v332 = vrot.slane %v325, 1
        %v333 = vrot.slane %v326, 1
        %v334 = vsel %vm331, %v332, %v333
        %v335 = vrot.slane %v327, 1
        %v336 = vsel %vm331, %v333, %v335
        %v339 = vadd.f32 %v321, %v334
        %v340 = vadd.f32 %v322, %v336
        %s341 = sld [smem:[#allocation2 + $0x2]]
        %v342 = vstv %s341
        %v343 = vmul.f32 %v342, %v285
        %v344 = vmul.f32 %v342, %v281
        %v345 = vmul.f32 %v342, %v286
        %vm349 = vcmask 1045504
        %v350 = vrot.slane %v343, 2
        %v351 = vrot.slane %v344, 2
        %v352 = vsel %vm349, %v350, %v351
        %v353 = vrot.slane %v345, 2
        %v354 = vsel %vm349, %v351, %v353
        %v357 = vadd.f32 %v339, %v352
        %v358 = vadd.f32 %v340, %v354
        %s359 = sld [smem:[#allocation2 + $0x3]]
        %v360 = vstv %s359
        %v361 = vmul.f32 %v360, %v295
        %v362 = vmul.f32 %v360, %v291
        %v363 = vadd.f32 %v357, %v361
        %v364 = vadd.f32 %v358, %v362
        %s365 = sld [smem:[#allocation2 + $0x4]]
        %v366 = vstv %s365
        %v367 = vmul.f32 %v366, %v295
        %v368 = vmul.f32 %v366, %v291
        %v369 = vmul.f32 %v366, %v296
        %v373 = vrot.slane %v367, 1
        %v374 = vrot.slane %v368, 1
        %v375 = vsel %vm331, %v373, %v374
        %v376 = vrot.slane %v369, 1
        %v377 = vsel %vm331, %v374, %v376
        %v380 = vadd.f32 %v363, %v375
        %v381 = vadd.f32 %v364, %v377
        %s382 = sld [smem:[#allocation2 + $0x5]]
        %v383 = vstv %s382
        %v384 = vmul.f32 %v383, %v295
        %v385 = vmul.f32 %v383, %v291
        %v386 = vmul.f32 %v383, %v296
        %v390 = vrot.slane %v384, 2
        %v391 = vrot.slane %v385, 2
        %v392 = vsel %vm349, %v390, %v391
        %v393 = vrot.slane %v386, 2
        %v394 = vsel %vm349, %v391, %v393
        %v397 = vadd.f32 %v380, %v392
        %v398 = vadd.f32 %v381, %v394
        %s399 = sld [smem:[#allocation2 + $0x6]]
        %v400 = vstv %s399
        %v401 = vmul.f32 %v400, %v305
        %v402 = vmul.f32 %v400, %v301
        %v403 = vadd.f32 %v397, %v401
        %v404 = vadd.f32 %v398, %v402
        %s405 = sld [smem:[#allocation2 + $0x7]]
        %v406 = vstv %s405
        %v407 = vmul.f32 %v406, %v305
        %v408 = vmul.f32 %v406, %v301
        %v409 = vmul.f32 %v406, %v306
        %v413 = vrot.slane %v407, 1
        %v414 = vrot.slane %v408, 1
        %v415 = vsel %vm331, %v413, %v414
        %v416 = vrot.slane %v409, 1
        %v417 = vsel %vm331, %v414, %v416
        %v420 = vadd.f32 %v403, %v415
        %v421 = vadd.f32 %v404, %v417
        %s422 = sld [smem:[#allocation2 + $0x8]]
        %v423 = vstv %s422
        %v424 = vmul.f32 %v423, %v305
        %v425 = vmul.f32 %v423, %v301
        %v426 = vmul.f32 %v423, %v306
        %v430 = vrot.slane %v424, 2
        %v431 = vrot.slane %v425, 2
        %v432 = vsel %vm349, %v430, %v431
        %v433 = vrot.slane %v426, 2
        %v434 = vsel %vm349, %v431, %v433
        %v437 = vadd.f32 %v420, %v432
        %v438 = vadd.f32 %v421, %v434
        %s439 = sld [smem:[#allocation2 + $0x9]]
        %v440 = vstv %s439
        %v441 = vmul.f32 %v440, %v315
        %v442 = vmul.f32 %v440, %v311
        %v443 = vadd.f32 %v437, %v441
        %v444 = vadd.f32 %v438, %v442
        %s445 = sld [smem:[#allocation2 + $0xa]]
        %v446 = vstv %s445
        %v447 = vmul.f32 %v446, %v315
        %v448 = vmul.f32 %v446, %v311
        %v449 = vmul.f32 %v446, %v316
        %v453 = vrot.slane %v447, 1
        %v454 = vrot.slane %v448, 1
        %v455 = vsel %vm331, %v453, %v454
        %v456 = vrot.slane %v449, 1
        %v457 = vsel %vm331, %v454, %v456
        %v460 = vadd.f32 %v443, %v455
        %v461 = vadd.f32 %v444, %v457
        %s462 = sld [smem:[#allocation2 + $0xb]]
        %v463 = vstv %s462
        %v464 = vmul.f32 %v463, %v315
        %v465 = vmul.f32 %v463, %v311
        %v466 = vmul.f32 %v463, %v316
        %v470 = vrot.slane %v464, 2
        %v471 = vrot.slane %v465, 2
        %v472 = vsel %vm349, %v470, %v471
        %v473 = vrot.slane %v466, 2
        %v474 = vsel %vm349, %v471, %v473
        %v477 = vadd.f32 %v460, %v472
        %v478 = vadd.f32 %v461, %v474
        %s479 = sld [smem:[#allocation4]]
        %v480 = vstv %s479
        %v481 = vadd.f32 %v477, %v480
        %v482 = vadd.f32 %v478, %v480
        %485 = vrot.lane.b32.xlu0 %v481, 1
        %v486 = vpop.permute.xlu0 %485
        %487 = vrot.lane.b32.xlu0 %v482, 1
        %v488 = vpop.permute.xlu0 %487
        %vm491 = vcmask 7168
        %v492 = vsel %vm491, 0.0, %v486
        %v493 = vsel %vm491, 0.0, %v488
        %vm494 = vcmask 138240
        %v495 = vsel %vm494, %v492, 0.0
        %v496 = vsel %vm494, %v493, 0.0
        %499 = vrot.lane.b32.xlu0 %v495, 16
        %v500 = vpop.permute.xlu0 %499
        %501 = vrot.lane.b32.xlu0 %v496, 16
        %v502 = vpop.permute.xlu0 %501
        %505 = vrot.lane.b32.xlu0 %v495, 32
        %v506 = vpop.permute.xlu0 %505
        %507 = vrot.lane.b32.xlu0 %v496, 32
        %v508 = vpop.permute.xlu0 %507
        %511 = vrot.lane.b32.xlu0 %v495, 48
        %v512 = vpop.permute.xlu0 %511
        %513 = vrot.lane.b32.xlu0 %v496, 48
        %v514 = vpop.permute.xlu0 %513
        %vm517 = vcmask 130048
        %v518 = vsel %vm517, %v495, %v500
        %v519 = vsel %vm517, %v496, %v502
        %vm520 = vcmask 261120
        %v521 = vsel %vm520, %v518, %v506
        %v522 = vsel %vm520, %v519, %v508
        %vm523 = vcmask 392192
        %v524 = vsel %vm523, %v521, %v512
        %v525 = vsel %vm523, %v522, %v514
        %v527 = vlaneseq
        %v528 = vshrl.u32 %v527, 7
        %v529 = vsub.s32 0, %v528
        %v530 = vrot.slane %v252, %v529
        %v532 = vmul.f32 %v530, %v524
        %v533 = vmul.f32 %v530, %v525
        %v534 = vadd.f32 %v532, 0.0
        %v535 = vadd.f32 %v533, 0.0
        %536 = vrot.lane.b32.xlu0 %v495, 127
        %v537 = vpop.permute.xlu0 %536
        %538 = vrot.lane.b32.xlu0 %v496, 127
        %v539 = vpop.permute.xlu0 %538
        %542 = vrot.lane.b32.xlu0 %v495, 15
        %v543 = vpop.permute.xlu0 %542
        %544 = vrot.lane.b32.xlu0 %v496, 15
        %v545 = vpop.permute.xlu0 %544
        %548 = vrot.lane.b32.xlu0 %v495, 31
        %v549 = vpop.permute.xlu0 %548
        %550 = vrot.lane.b32.xlu0 %v496, 31
        %v551 = vpop.permute.xlu0 %550
        %554 = vrot.lane.b32.xlu0 %v495, 47
        %v555 = vpop.permute.xlu0 %554
        %556 = vrot.lane.b32.xlu0 %v496, 47
        %v557 = vpop.permute.xlu0 %556
        %v560 = vsel %vm517, %v537, %v543
        %v561 = vsel %vm517, %v539, %v545
        %v562 = vsel %vm520, %v560, %v549
        %v563 = vsel %vm520, %v561, %v551
        %v564 = vsel %vm523, %v562, %v555
        %v565 = vsel %vm523, %v563, %v557
        %v567 = vlaneseq
        %v568 = vshrl.u32 %v567, 7
        %v569 = vsub.s32 0, %v568
        %v570 = vrot.slane %v253, %v569
        %v572 = vmul.f32 %v570, %v564
        %v573 = vmul.f32 %v570, %v565
        %v574 = vadd.f32 %v534, %v572
        %v575 = vadd.f32 %v535, %v573
        %576 = vrot.lane.b32.xlu0 %v495, 126
        %v577 = vpop.permute.xlu0 %576
        %578 = vrot.lane.b32.xlu0 %v496, 126
        %v579 = vpop.permute.xlu0 %578
        %582 = vrot.lane.b32.xlu0 %v495, 14
        %v583 = vpop.permute.xlu0 %582
        %584 = vrot.lane.b32.xlu0 %v496, 14
        %v585 = vpop.permute.xlu0 %584
        %588 = vrot.lane.b32.xlu0 %v495, 30
        %v589 = vpop.permute.xlu0 %588
        %590 = vrot.lane.b32.xlu0 %v496, 30
        %v591 = vpop.permute.xlu0 %590
        %594 = vrot.lane.b32.xlu0 %v495, 46
        %v595 = vpop.permute.xlu0 %594
        %596 = vrot.lane.b32.xlu0 %v496, 46
        %v597 = vpop.permute.xlu0 %596
        %v600 = vsel %vm517, %v577, %v583
        %v601 = vsel %vm517, %v579, %v585
        %v602 = vsel %vm520, %v600, %v589
        %v603 = vsel %vm520, %v601, %v591
        %v604 = vsel %vm523, %v602, %v595
        %v605 = vsel %vm523, %v603, %v597
        %v607 = vlaneseq
        %v608 = vshrl.u32 %v607, 7
        %v609 = vsub.s32 0, %v608
        %v610 = vrot.slane %v254, %v609
        %v612 = vmul.f32 %v610, %v604
        %v613 = vmul.f32 %v610, %v605
        %v614 = vadd.f32 %v574, %v612
        %v615 = vadd.f32 %v575, %v613
        %v617 = vlaneseq
        %v618 = vshrl.u32 %v617, 7
        %v619 = vsub.s32 0, %v618
        %v620 = vrot.slane %v264, %v619
        %v622 = vadd.f32 %v614, %v620
        %v623 = vadd.f32 %v615, %v620
        %v624 = vmax.f32 %v622, 0.0
        %v625 = vmax.f32 %v623, 0.0
        %v626 = vmin.f32 %v624, 6.0
        %v627 = vmin.f32 %v625, 6.0
        %s628 = sld [smem:[#allocation2 + $0x80]]
        %v629 = vstv %s628
        %v630 = vmul.f32 %v629, %v285
        %v631 = vmul.f32 %v629, %v281
        %v632 = vadd.f32 %v630, 0.0
        %v633 = vadd.f32 %v631, 0.0
        %s634 = sld [smem:[#allocation2 + $0x81]]
        %v635 = vstv %s634
        %v636 = vmul.f32 %v635, %v285
        %v637 = vmul.f32 %v635, %v281
        %v638 = vmul.f32 %v635, %v286
        %v642 = vrot.slane %v636, 1
        %v643 = vrot.slane %v637, 1
        %v644 = vsel %vm331, %v642, %v643
        %v645 = vrot.slane %v638, 1
        %v646 = vsel %vm331, %v643, %v645
        %v649 = vadd.f32 %v632, %v644
        %v650 = vadd.f32 %v633, %v646
        %s651 = sld [smem:[#allocation2 + $0x82]]
        %v652 = vstv %s651
        %v653 = vmul.f32 %v652, %v285
        %v654 = vmul.f32 %v652, %v281
        %v655 = vmul.f32 %v652, %v286
        %v659 = vrot.slane %v653, 2
        %v660 = vrot.slane %v654, 2
        %v661 = vsel %vm349, %v659, %v660
        %v662 = vrot.slane %v655, 2
        %v663 = vsel %vm349, %v660, %v662
        %v666 = vadd.f32 %v649, %v661
        %v667 = vadd.f32 %v650, %v663
        %s668 = sld [smem:[#allocation2 + $0x83]]
        %v669 = vstv %s668
        %v670 = vmul.f32 %v669, %v295
        %v671 = vmul.f32 %v669, %v291
        %v672 = vadd.f32 %v666, %v670
        %v673 = vadd.f32 %v667, %v671
        %s674 = sld [smem:[#allocation2 + $0x84]]
        %v675 = vstv %s674
        %v676 = vmul.f32 %v675, %v295
        %v677 = vmul.f32 %v675, %v291
        %v678 = vmul.f32 %v675, %v296
        %v682 = vrot.slane %v676, 1
        %v683 = vrot.slane %v677, 1
        %v684 = vsel %vm331, %v682, %v683
        %v685 = vrot.slane %v678, 1
        %v686 = vsel %vm331, %v683, %v685
        %v689 = vadd.f32 %v672, %v684
        %v690 = vadd.f32 %v673, %v686
        %s691 = sld [smem:[#allocation2 + $0x85]]
        %v692 = vstv %s691
        %v693 = vmul.f32 %v692, %v295
        %v694 = vmul.f32 %v692, %v291
        %v695 = vmul.f32 %v692, %v296
        %v699 = vrot.slane %v693, 2
        %v700 = vrot.slane %v694, 2
        %v701 = vsel %vm349, %v699, %v700
        %v702 = vrot.slane %v695, 2
        %v703 = vsel %vm349, %v700, %v702
        %v706 = vadd.f32 %v689, %v701
        %v707 = vadd.f32 %v690, %v703
        %s708 = sld [smem:[#allocation2 + $0x86]]
        %v709 = vstv %s708
        %v710 = vmul.f32 %v709, %v305
        %v711 = vmul.f32 %v709, %v301
        %v712 = vadd.f32 %v706, %v710
        %v713 = vadd.f32 %v707, %v711
        %s714 = sld [smem:[#allocation2 + $0x87]]
        %v715 = vstv %s714
        %v716 = vmul.f32 %v715, %v305
        %v717 = vmul.f32 %v715, %v301
        %v718 = vmul.f32 %v715, %v306
        %v722 = vrot.slane %v716, 1
        %v723 = vrot.slane %v717, 1
        %v724 = vsel %vm331, %v722, %v723
        %v725 = vrot.slane %v718, 1
        %v726 = vsel %vm331, %v723, %v725
        %v729 = vadd.f32 %v712, %v724
        %v730 = vadd.f32 %v713, %v726
        %s731 = sld [smem:[#allocation2 + $0x88]]
        %v732 = vstv %s731
        %v733 = vmul.f32 %v732, %v305
        %v734 = vmul.f32 %v732, %v301
        %v735 = vmul.f32 %v732, %v306
        %v739 = vrot.slane %v733, 2
        %v740 = vrot.slane %v734, 2
        %v741 = vsel %vm349, %v739, %v740
        %v742 = vrot.slane %v735, 2
        %v743 = vsel %vm349, %v740, %v742
        %v746 = vadd.f32 %v729, %v741
        %v747 = vadd.f32 %v730, %v743
        %s748 = sld [smem:[#allocation2 + $0x89]]
        %v749 = vstv %s748
        %v750 = vmul.f32 %v749, %v315
        %v751 = vmul.f32 %v749, %v311
        %v752 = vadd.f32 %v746, %v750
        %v753 = vadd.f32 %v747, %v751
        %s754 = sld [smem:[#allocation2 + $0x8a]]
        %v755 = vstv %s754
        %v756 = vmul.f32 %v755, %v315
        %v757 = vmul.f32 %v755, %v311
        %v758 = vmul.f32 %v755, %v316
        %v762 = vrot.slane %v756, 1
        %v763 = vrot.slane %v757, 1
        %v764 = vsel %vm331, %v762, %v763
        %v765 = vrot.slane %v758, 1
        %v766 = vsel %vm331, %v763, %v765
        %v769 = vadd.f32 %v752, %v764
        %v770 = vadd.f32 %v753, %v766
        %s771 = sld [smem:[#allocation2 + $0x8b]]
        %v772 = vstv %s771
        %v773 = vmul.f32 %v772, %v315
        %v774 = vmul.f32 %v772, %v311
        %v775 = vmul.f32 %v772, %v316
        %v779 = vrot.slane %v773, 2
        %v780 = vrot.slane %v774, 2
        %v781 = vsel %vm349, %v779, %v780
        %v782 = vrot.slane %v775, 2
        %v783 = vsel %vm349, %v780, %v782
        %v786 = vadd.f32 %v769, %v781
        %v787 = vadd.f32 %v770, %v783
        %s788 = sld [smem:[#allocation4 + $0x1]]
        %v789 = vstv %s788
        %v790 = vadd.f32 %v786, %v789
        %v791 = vadd.f32 %v787, %v789
        %794 = vrot.lane.b32.xlu0 %v790, 1
        %v795 = vpop.permute.xlu0 %794
        %796 = vrot.lane.b32.xlu0 %v791, 1
        %v797 = vpop.permute.xlu0 %796
        %v800 = vsel %vm491, 0.0, %v795
        %v801 = vsel %vm491, 0.0, %v797
        %v802 = vsel %vm494, %v800, 0.0
        %v803 = vsel %vm494, %v801, 0.0
        %806 = vrot.lane.b32.xlu0 %v802, 16
        %v807 = vpop.permute.xlu0 %806
        %808 = vrot.lane.b32.xlu0 %v803, 16
        %v809 = vpop.permute.xlu0 %808
        %812 = vrot.lane.b32.xlu0 %v802, 32
        %v813 = vpop.permute.xlu0 %812
        %814 = vrot.lane.b32.xlu0 %v803, 32
        %v815 = vpop.permute.xlu0 %814
        %818 = vrot.lane.b32.xlu0 %v802, 48
        %v819 = vpop.permute.xlu0 %818
        %820 = vrot.lane.b32.xlu0 %v803, 48
        %v821 = vpop.permute.xlu0 %820
        %v824 = vsel %vm517, %v802, %v807
        %v825 = vsel %vm517, %v803, %v809
        %v826 = vsel %vm520, %v824, %v813
        %v827 = vsel %vm520, %v825, %v815
        %v828 = vsel %vm523, %v826, %v819
        %v829 = vsel %vm523, %v827, %v821
        %v831 = vlaneseq
        %v832 = vshrl.u32 %v831, 7
        %v833 = vsub.s32 0, %v832
        %v834 = vrot.slane %v255, %v833
        %v836 = vmul.f32 %v834, %v828
        %v837 = vmul.f32 %v834, %v829
        %v838 = vadd.f32 %v836, 0.0
        %v839 = vadd.f32 %v837, 0.0
        %840 = vrot.lane.b32.xlu0 %v802, 127
        %v841 = vpop.permute.xlu0 %840
        %842 = vrot.lane.b32.xlu0 %v803, 127
        %v843 = vpop.permute.xlu0 %842
        %846 = vrot.lane.b32.xlu0 %v802, 15
        %v847 = vpop.permute.xlu0 %846
        %848 = vrot.lane.b32.xlu0 %v803, 15
        %v849 = vpop.permute.xlu0 %848
        %852 = vrot.lane.b32.xlu0 %v802, 31
        %v853 = vpop.permute.xlu0 %852
        %854 = vrot.lane.b32.xlu0 %v803, 31
        %v855 = vpop.permute.xlu0 %854
        %858 = vrot.lane.b32.xlu0 %v802, 47
        %v859 = vpop.permute.xlu0 %858
        %860 = vrot.lane.b32.xlu0 %v803, 47
        %v861 = vpop.permute.xlu0 %860
        %v864 = vsel %vm517, %v841, %v847
        %v865 = vsel %vm517, %v843, %v849
        %v866 = vsel %vm520, %v864, %v853
        %v867 = vsel %vm520, %v865, %v855
        %v868 = vsel %vm523, %v866, %v859
        %v869 = vsel %vm523, %v867, %v861
        %v871 = vlaneseq
        %v872 = vshrl.u32 %v871, 7
        %v873 = vsub.s32 0, %v872
        %v874 = vrot.slane %v256, %v873
        %v876 = vmul.f32 %v874, %v868
        %v877 = vmul.f32 %v874, %v869
        %v878 = vadd.f32 %v838, %v876
        %v879 = vadd.f32 %v839, %v877
        %880 = vrot.lane.b32.xlu0 %v802, 126
        %v881 = vpop.permute.xlu0 %880
        %882 = vrot.lane.b32.xlu0 %v803, 126
        %v883 = vpop.permute.xlu0 %882
        %886 = vrot.lane.b32.xlu0 %v802, 14
        %v887 = vpop.permute.xlu0 %886
        %888 = vrot.lane.b32.xlu0 %v803, 14
        %v889 = vpop.permute.xlu0 %888
        %892 = vrot.lane.b32.xlu0 %v802, 30
        %v893 = vpop.permute.xlu0 %892
        %894 = vrot.lane.b32.xlu0 %v803, 30
        %v895 = vpop.permute.xlu0 %894
        %898 = vrot.lane.b32.xlu0 %v802, 46
        %v899 = vpop.permute.xlu0 %898
        %900 = vrot.lane.b32.xlu0 %v803, 46
        %v901 = vpop.permute.xlu0 %900
        %v904 = vsel %vm517, %v881, %v887
        %v905 = vsel %vm517, %v883, %v889
        %v906 = vsel %vm520, %v904, %v893
        %v907 = vsel %vm520, %v905, %v895
        %v908 = vsel %vm523, %v906, %v899
        %v909 = vsel %vm523, %v907, %v901
        %v911 = vlaneseq
        %v912 = vshrl.u32 %v911, 7
        %v913 = vsub.s32 0, %v912
        %v914 = vrot.slane %v257, %v913
        %v916 = vmul.f32 %v914, %v908
        %v917 = vmul.f32 %v914, %v909
        %v918 = vadd.f32 %v878, %v916
        %v919 = vadd.f32 %v879, %v917
        %v921 = vlaneseq
        %v922 = vshrl.u32 %v921, 7
        %v923 = vsub.s32 0, %v922
        %v924 = vrot.slane %v265, %v923
        %v926 = vadd.f32 %v918, %v924
        %v927 = vadd.f32 %v919, %v924
        %v928 = vmax.f32 %v926, 0.0
        %v929 = vmax.f32 %v927, 0.0
        %v930 = vmin.f32 %v928, 6.0
        %v931 = vmin.f32 %v929, 6.0
        %s932 = sld [smem:[#allocation2 + $0x100]]
        %v933 = vstv %s932
        %v934 = vmul.f32 %v933, %v285
        %v935 = vmul.f32 %v933, %v281
        %v936 = vadd.f32 %v934, 0.0
        %v937 = vadd.f32 %v935, 0.0
        %s938 = sld [smem:[#allocation2 + $0x101]]
        %v939 = vstv %s938
        %v940 = vmul.f32 %v939, %v285
        %v941 = vmul.f32 %v939, %v281
        %v942 = vmul.f32 %v939, %v286
        %v946 = vrot.slane %v940, 1
        %v947 = vrot.slane %v941, 1
        %v948 = vsel %vm331, %v946, %v947
        %v949 = vrot.slane %v942, 1
        %v950 = vsel %vm331, %v947, %v949
        %v953 = vadd.f32 %v936, %v948
        %v954 = vadd.f32 %v937, %v950
        %s955 = sld [smem:[#allocation2 + $0x102]]
        %v956 = vstv %s955
        %v957 = vmul.f32 %v956, %v285
        %v958 = vmul.f32 %v956, %v281
        %v959 = vmul.f32 %v956, %v286
        %v963 = vrot.slane %v957, 2
        %v964 = vrot.slane %v958, 2
        %v965 = vsel %vm349, %v963, %v964
        %v966 = vrot.slane %v959, 2
        %v967 = vsel %vm349, %v964, %v966
        %v970 = vadd.f32 %v953, %v965
        %v971 = vadd.f32 %v954, %v967
        %s972 = sld [smem:[#allocation2 + $0x103]]
        %v973 = vstv %s972
        %v974 = vmul.f32 %v973, %v295
        %v975 = vmul.f32 %v973, %v291
        %v976 = vadd.f32 %v970, %v974
        %v977 = vadd.f32 %v971, %v975
        %s978 = sld [smem:[#allocation2 + $0x104]]
        %v979 = vstv %s978
        %v980 = vmul.f32 %v979, %v295
        %v981 = vmul.f32 %v979, %v291
        %v982 = vmul.f32 %v979, %v296
        %v986 = vrot.slane %v980, 1
        %v987 = vrot.slane %v981, 1
        %v988 = vsel %vm331, %v986, %v987
        %v989 = vrot.slane %v982, 1
        %v990 = vsel %vm331, %v987, %v989
        %v993 = vadd.f32 %v976, %v988
        %v994 = vadd.f32 %v977, %v990
        %s995 = sld [smem:[#allocation2 + $0x105]]
        %v996 = vstv %s995
        %v997 = vmul.f32 %v996, %v295
        %v998 = vmul.f32 %v996, %v291
        %v999 = vmul.f32 %v996, %v296
        %v1003 = vrot.slane %v997, 2
        %v1004 = vrot.slane %v998, 2
        %v1005 = vsel %vm349, %v1003, %v1004
        %v1006 = vrot.slane %v999, 2
        %v1007 = vsel %vm349, %v1004, %v1006
        %v1010 = vadd.f32 %v993, %v1005
        %v1011 = vadd.f32 %v994, %v1007
        %s1012 = sld [smem:[#allocation2 + $0x106]]
        %v1013 = vstv %s1012
        %v1014 = vmul.f32 %v1013, %v305
        %v1015 = vmul.f32 %v1013, %v301
        %v1016 = vadd.f32 %v1010, %v1014
        %v1017 = vadd.f32 %v1011, %v1015
        %s1018 = sld [smem:[#allocation2 + $0x107]]
        %v1019 = vstv %s1018
        %v1020 = vmul.f32 %v1019, %v305
        %v1021 = vmul.f32 %v1019, %v301
        %v1022 = vmul.f32 %v1019, %v306
        %v1026 = vrot.slane %v1020, 1
        %v1027 = vrot.slane %v1021, 1
        %v1028 = vsel %vm331, %v1026, %v1027
        %v1029 = vrot.slane %v1022, 1
        %v1030 = vsel %vm331, %v1027, %v1029
        %v1033 = vadd.f32 %v1016, %v1028
        %v1034 = vadd.f32 %v1017, %v1030
        %s1035 = sld [smem:[#allocation2 + $0x108]]
        %v1036 = vstv %s1035
        %v1037 = vmul.f32 %v1036, %v305
        %v1038 = vmul.f32 %v1036, %v301
        %v1039 = vmul.f32 %v1036, %v306
        %v1043 = vrot.slane %v1037, 2
        %v1044 = vrot.slane %v1038, 2
        %v1045 = vsel %vm349, %v1043, %v1044
        %v1046 = vrot.slane %v1039, 2
        %v1047 = vsel %vm349, %v1044, %v1046
        %v1050 = vadd.f32 %v1033, %v1045
        %v1051 = vadd.f32 %v1034, %v1047
        %s1052 = sld [smem:[#allocation2 + $0x109]]
        %v1053 = vstv %s1052
        %v1054 = vmul.f32 %v1053, %v315
        %v1055 = vmul.f32 %v1053, %v311
        %v1056 = vadd.f32 %v1050, %v1054
        %v1057 = vadd.f32 %v1051, %v1055
        %s1058 = sld [smem:[#allocation2 + $0x10a]]
        %v1059 = vstv %s1058
        %v1060 = vmul.f32 %v1059, %v315
        %v1061 = vmul.f32 %v1059, %v311
        %v1062 = vmul.f32 %v1059, %v316
        %v1066 = vrot.slane %v1060, 1
        %v1067 = vrot.slane %v1061, 1
        %v1068 = vsel %vm331, %v1066, %v1067
        %v1069 = vrot.slane %v1062, 1
        %v1070 = vsel %vm331, %v1067, %v1069
        %v1073 = vadd.f32 %v1056, %v1068
        %v1074 = vadd.f32 %v1057, %v1070
        %s1075 = sld [smem:[#allocation2 + $0x10b]]
        %v1076 = vstv %s1075
        %v1077 = vmul.f32 %v1076, %v315
        %v1078 = vmul.f32 %v1076, %v311
        %v1079 = vmul.f32 %v1076, %v316
        %v1083 = vrot.slane %v1077, 2
        %v1084 = vrot.slane %v1078, 2
        %v1085 = vsel %vm349, %v1083, %v1084
        %v1086 = vrot.slane %v1079, 2
        %v1087 = vsel %vm349, %v1084, %v1086
        %v1090 = vadd.f32 %v1073, %v1085
        %v1091 = vadd.f32 %v1074, %v1087
        %s1092 = sld [smem:[#allocation4 + $0x2]]
        %v1093 = vstv %s1092
        %v1094 = vadd.f32 %v1090, %v1093
        %v1095 = vadd.f32 %v1091, %v1093
        %1098 = vrot.lane.b32.xlu0 %v1094, 1
        %v1099 = vpop.permute.xlu0 %1098
        %1100 = vrot.lane.b32.xlu0 %v1095, 1
        %v1101 = vpop.permute.xlu0 %1100
        %v1104 = vsel %vm491, 0.0, %v1099
        %v1105 = vsel %vm491, 0.0, %v1101
        %v1106 = vsel %vm494, %v1104, 0.0
        %v1107 = vsel %vm494, %v1105, 0.0
        %1110 = vrot.lane.b32.xlu0 %v1106, 16
        %v1111 = vpop.permute.xlu0 %1110
        %1112 = vrot.lane.b32.xlu0 %v1107, 16
        %v1113 = vpop.permute.xlu0 %1112
        %1116 = vrot.lane.b32.xlu0 %v1106, 32
        %v1117 = vpop.permute.xlu0 %1116
        %1118 = vrot.lane.b32.xlu0 %v1107, 32
        %v1119 = vpop.permute.xlu0 %1118
        %1122 = vrot.lane.b32.xlu0 %v1106, 48
        %v1123 = vpop.permute.xlu0 %1122
        %1124 = vrot.lane.b32.xlu0 %v1107, 48
        %v1125 = vpop.permute.xlu0 %1124
        %v1128 = vsel %vm517, %v1106, %v1111
        %v1129 = vsel %vm517, %v1107, %v1113
        %v1130 = vsel %vm520, %v1128, %v1117
        %v1131 = vsel %vm520, %v1129, %v1119
        %v1132 = vsel %vm523, %v1130, %v1123
        %v1133 = vsel %vm523, %v1131, %v1125
        %v1135 = vlaneseq
        %v1136 = vshrl.u32 %v1135, 7
        %v1137 = vsub.s32 0, %v1136
        %v1138 = vrot.slane %v258, %v1137
        %v1140 = vmul.f32 %v1138, %v1132
        %v1141 = vmul.f32 %v1138, %v1133
        %v1142 = vadd.f32 %v1140, 0.0
        %v1143 = vadd.f32 %v1141, 0.0
        %1144 = vrot.lane.b32.xlu0 %v1106, 127
        %v1145 = vpop.permute.xlu0 %1144
        %1146 = vrot.lane.b32.xlu0 %v1107, 127
        %v1147 = vpop.permute.xlu0 %1146
        %1150 = vrot.lane.b32.xlu0 %v1106, 15
        %v1151 = vpop.permute.xlu0 %1150
        %1152 = vrot.lane.b32.xlu0 %v1107, 15
        %v1153 = vpop.permute.xlu0 %1152
        %1156 = vrot.lane.b32.xlu0 %v1106, 31
        %v1157 = vpop.permute.xlu0 %1156
        %1158 = vrot.lane.b32.xlu0 %v1107, 31
        %v1159 = vpop.permute.xlu0 %1158
        %1162 = vrot.lane.b32.xlu0 %v1106, 47
        %v1163 = vpop.permute.xlu0 %1162
        %1164 = vrot.lane.b32.xlu0 %v1107, 47
        %v1165 = vpop.permute.xlu0 %1164
        %v1168 = vsel %vm517, %v1145, %v1151
        %v1169 = vsel %vm517, %v1147, %v1153
        %v1170 = vsel %vm520, %v1168, %v1157
        %v1171 = vsel %vm520, %v1169, %v1159
        %v1172 = vsel %vm523, %v1170, %v1163
        %v1173 = vsel %vm523, %v1171, %v1165
        %v1175 = vlaneseq
        %v1176 = vshrl.u32 %v1175, 7
        %v1177 = vsub.s32 0, %v1176
        %v1178 = vrot.slane %v259, %v1177
        %v1180 = vmul.f32 %v1178, %v1172
        %v1181 = vmul.f32 %v1178, %v1173
        %v1182 = vadd.f32 %v1142, %v1180
        %v1183 = vadd.f32 %v1143, %v1181
        %1184 = vrot.lane.b32.xlu0 %v1106, 126
        %v1185 = vpop.permute.xlu0 %1184
        %1186 = vrot.lane.b32.xlu0 %v1107, 126
        %v1187 = vpop.permute.xlu0 %1186
        %1190 = vrot.lane.b32.xlu0 %v1106, 14
        %v1191 = vpop.permute.xlu0 %1190
        %1192 = vrot.lane.b32.xlu0 %v1107, 14
        %v1193 = vpop.permute.xlu0 %1192
        %1196 = vrot.lane.b32.xlu0 %v1106, 30
        %v1197 = vpop.permute.xlu0 %1196
        %1198 = vrot.lane.b32.xlu0 %v1107, 30
        %v1199 = vpop.permute.xlu0 %1198
        %1202 = vrot.lane.b32.xlu0 %v1106, 46
        %v1203 = vpop.permute.xlu0 %1202
        %1204 = vrot.lane.b32.xlu0 %v1107, 46
        %v1205 = vpop.permute.xlu0 %1204
        %v1208 = vsel %vm517, %v1185, %v1191
        %v1209 = vsel %vm517, %v1187, %v1193
        %v1210 = vsel %vm520, %v1208, %v1197
        %v1211 = vsel %vm520, %v1209, %v1199
        %v1212 = vsel %vm523, %v1210, %v1203
        %v1213 = vsel %vm523, %v1211, %v1205
        %v1215 = vlaneseq
        %v1216 = vshrl.u32 %v1215, 7
        %v1217 = vsub.s32 0, %v1216
        %v1218 = vrot.slane %v260, %v1217
        %v1220 = vmul.f32 %v1218, %v1212
        %v1221 = vmul.f32 %v1218, %v1213
        %v1222 = vadd.f32 %v1182, %v1220
        %v1223 = vadd.f32 %v1183, %v1221
        %v1225 = vlaneseq
        %v1226 = vshrl.u32 %v1225, 7
        %v1227 = vsub.s32 0, %v1226
        %v1228 = vrot.slane %v266, %v1227
        %v1230 = vadd.f32 %v1222, %v1228
        %v1231 = vadd.f32 %v1223, %v1228
        %v1232 = vmax.f32 %v1230, 0.0
        %v1233 = vmax.f32 %v1231, 0.0
        %v1234 = vmin.f32 %v1232, 6.0
        %v1235 = vmin.f32 %v1233, 6.0
        %s1236 = sld [smem:[#allocation2 + $0x180]]
        %v1237 = vstv %s1236
        %v1238 = vmul.f32 %v1237, %v285
        %v1239 = vmul.f32 %v1237, %v281
        %v1240 = vadd.f32 %v1238, 0.0
        %v1241 = vadd.f32 %v1239, 0.0
        %s1242 = sld [smem:[#allocation2 + $0x181]]
        %v1243 = vstv %s1242
        %v1244 = vmul.f32 %v1243, %v285
        %v1245 = vmul.f32 %v1243, %v281
        %v1246 = vmul.f32 %v1243, %v286
        %v1250 = vrot.slane %v1244, 1
        %v1251 = vrot.slane %v1245, 1
        %v1252 = vsel %vm331, %v1250, %v1251
        %v1253 = vrot.slane %v1246, 1
        %v1254 = vsel %vm331, %v1251, %v1253
        %v1257 = vadd.f32 %v1240, %v1252
        %v1258 = vadd.f32 %v1241, %v1254
        %s1259 = sld [smem:[#allocation2 + $0x182]]
        %v1260 = vstv %s1259
        %v1261 = vmul.f32 %v1260, %v285
        %v1262 = vmul.f32 %v1260, %v281
        %v1263 = vmul.f32 %v1260, %v286
        %v1267 = vrot.slane %v1261, 2
        %v1268 = vrot.slane %v1262, 2
        %v1269 = vsel %vm349, %v1267, %v1268
        %v1270 = vrot.slane %v1263, 2
        %v1271 = vsel %vm349, %v1268, %v1270
        %v1274 = vadd.f32 %v1257, %v1269
        %v1275 = vadd.f32 %v1258, %v1271
        %s1276 = sld [smem:[#allocation2 + $0x183]]
        %v1277 = vstv %s1276
        %v1278 = vmul.f32 %v1277, %v295
        %v1279 = vmul.f32 %v1277, %v291
        %v1280 = vadd.f32 %v1274, %v1278
        %v1281 = vadd.f32 %v1275, %v1279
        %s1282 = sld [smem:[#allocation2 + $0x184]]
        %v1283 = vstv %s1282
        %v1284 = vmul.f32 %v1283, %v295
        %v1285 = vmul.f32 %v1283, %v291
        %v1286 = vmul.f32 %v1283, %v296
        %v1290 = vrot.slane %v1284, 1
        %v1291 = vrot.slane %v1285, 1
        %v1292 = vsel %vm331, %v1290, %v1291
        %v1293 = vrot.slane %v1286, 1
        %v1294 = vsel %vm331, %v1291, %v1293
        %v1297 = vadd.f32 %v1280, %v1292
        %v1298 = vadd.f32 %v1281, %v1294
        %s1299 = sld [smem:[#allocation2 + $0x185]]
        %v1300 = vstv %s1299
        %v1301 = vmul.f32 %v1300, %v295
        %v1302 = vmul.f32 %v1300, %v291
        %v1303 = vmul.f32 %v1300, %v296
        %v1307 = vrot.slane %v1301, 2
        %v1308 = vrot.slane %v1302, 2
        %v1309 = vsel %vm349, %v1307, %v1308
        %v1310 = vrot.slane %v1303, 2
        %v1311 = vsel %vm349, %v1308, %v1310
        %v1314 = vadd.f32 %v1297, %v1309
        %v1315 = vadd.f32 %v1298, %v1311
        %s1316 = sld [smem:[#allocation2 + $0x186]]
        %v1317 = vstv %s1316
        %v1318 = vmul.f32 %v1317, %v305
        %v1319 = vmul.f32 %v1317, %v301
        %v1320 = vadd.f32 %v1314, %v1318
        %v1321 = vadd.f32 %v1315, %v1319
        %s1322 = sld [smem:[#allocation2 + $0x187]]
        %v1323 = vstv %s1322
        %v1324 = vmul.f32 %v1323, %v305
        %v1325 = vmul.f32 %v1323, %v301
        %v1326 = vmul.f32 %v1323, %v306
        %v1330 = vrot.slane %v1324, 1
        %v1331 = vrot.slane %v1325, 1
        %v1332 = vsel %vm331, %v1330, %v1331
        %v1333 = vrot.slane %v1326, 1
        %v1334 = vsel %vm331, %v1331, %v1333
        %v1337 = vadd.f32 %v1320, %v1332
        %v1338 = vadd.f32 %v1321, %v1334
        %s1339 = sld [smem:[#allocation2 + $0x188]]
        %v1340 = vstv %s1339
        %v1341 = vmul.f32 %v1340, %v305
        %v1342 = vmul.f32 %v1340, %v301
        %v1343 = vmul.f32 %v1340, %v306
        %v1347 = vrot.slane %v1341, 2
        %v1348 = vrot.slane %v1342, 2
        %v1349 = vsel %vm349, %v1347, %v1348
        %v1350 = vrot.slane %v1343, 2
        %v1351 = vsel %vm349, %v1348, %v1350
        %v1354 = vadd.f32 %v1337, %v1349
        %v1355 = vadd.f32 %v1338, %v1351
        %s1356 = sld [smem:[#allocation2 + $0x189]]
        %v1357 = vstv %s1356
        %v1358 = vmul.f32 %v1357, %v315
        %v1359 = vmul.f32 %v1357, %v311
        %v1360 = vadd.f32 %v1354, %v1358
        %v1361 = vadd.f32 %v1355, %v1359
        %s1362 = sld [smem:[#allocation2 + $0x18a]]
        %v1363 = vstv %s1362
        %v1364 = vmul.f32 %v1363, %v315
        %v1365 = vmul.f32 %v1363, %v311
        %v1366 = vmul.f32 %v1363, %v316
        %v1370 = vrot.slane %v1364, 1
        %v1371 = vrot.slane %v1365, 1
        %v1372 = vsel %vm331, %v1370, %v1371
        %v1373 = vrot.slane %v1366, 1
        %v1374 = vsel %vm331, %v1371, %v1373
        %v1377 = vadd.f32 %v1360, %v1372
        %v1378 = vadd.f32 %v1361, %v1374
        %s1379 = sld [smem:[#allocation2 + $0x18b]]
        %v1380 = vstv %s1379
        %v1381 = vmul.f32 %v1380, %v315
        %v1382 = vmul.f32 %v1380, %v311
        %v1383 = vmul.f32 %v1380, %v316
        %v1387 = vrot.slane %v1381, 2
        %v1388 = vrot.slane %v1382, 2
        %v1389 = vsel %vm349, %v1387, %v1388
        %v1390 = vrot.slane %v1383, 2
        %v1391 = vsel %vm349, %v1388, %v1390
        %v1394 = vadd.f32 %v1377, %v1389
        %v1395 = vadd.f32 %v1378, %v1391
        %s1396 = sld [smem:[#allocation4 + $0x3]]
        %v1397 = vstv %s1396
        %v1398 = vadd.f32 %v1394, %v1397
        %v1399 = vadd.f32 %v1395, %v1397
        %1402 = vrot.lane.b32.xlu0 %v1398, 1
        %v1403 = vpop.permute.xlu0 %1402
        %1404 = vrot.lane.b32.xlu0 %v1399, 1
        %v1405 = vpop.permute.xlu0 %1404
        %v1408 = vsel %vm491, 0.0, %v1403
        %v1409 = vsel %vm491, 0.0, %v1405
        %v1410 = vsel %vm494, %v1408, 0.0
        %v1411 = vsel %vm494, %v1409, 0.0
        %1414 = vrot.lane.b32.xlu0 %v1410, 16
        %v1415 = vpop.permute.xlu0 %1414
        %1416 = vrot.lane.b32.xlu0 %v1411, 16
        %v1417 = vpop.permute.xlu0 %1416
        %1420 = vrot.lane.b32.xlu0 %v1410, 32
        %v1421 = vpop.permute.xlu0 %1420
        %1422 = vrot.lane.b32.xlu0 %v1411, 32
        %v1423 = vpop.permute.xlu0 %1422
        %1426 = vrot.lane.b32.xlu0 %v1410, 48
        %v1427 = vpop.permute.xlu0 %1426
        %1428 = vrot.lane.b32.xlu0 %v1411, 48
        %v1429 = vpop.permute.xlu0 %1428
        %v1432 = vsel %vm517, %v1410, %v1415
        %v1433 = vsel %vm517, %v1411, %v1417
        %v1434 = vsel %vm520, %v1432, %v1421
        %v1435 = vsel %vm520, %v1433, %v1423
        %v1436 = vsel %vm523, %v1434, %v1427
        %v1437 = vsel %vm523, %v1435, %v1429
        %v1439 = vlaneseq
        %v1440 = vshrl.u32 %v1439, 7
        %v1441 = vsub.s32 0, %v1440
        %v1442 = vrot.slane %v261, %v1441
        %v1444 = vmul.f32 %v1442, %v1436
        %v1445 = vmul.f32 %v1442, %v1437
        %v1446 = vadd.f32 %v1444, 0.0
        %v1447 = vadd.f32 %v1445, 0.0
        %1448 = vrot.lane.b32.xlu0 %v1410, 127
        %v1449 = vpop.permute.xlu0 %1448
        %1450 = vrot.lane.b32.xlu0 %v1411, 127
        %v1451 = vpop.permute.xlu0 %1450
        %1454 = vrot.lane.b32.xlu0 %v1410, 15
        %v1455 = vpop.permute.xlu0 %1454
        %1456 = vrot.lane.b32.xlu0 %v1411, 15
        %v1457 = vpop.permute.xlu0 %1456
        %1460 = vrot.lane.b32.xlu0 %v1410, 31
        %v1461 = vpop.permute.xlu0 %1460
        %1462 = vrot.lane.b32.xlu0 %v1411, 31
        %v1463 = vpop.permute.xlu0 %1462
        %1466 = vrot.lane.b32.xlu0 %v1410, 47
        %v1467 = vpop.permute.xlu0 %1466
        %1468 = vrot.lane.b32.xlu0 %v1411, 47
        %v1469 = vpop.permute.xlu0 %1468
        %v1472 = vsel %vm517, %v1449, %v1455
        %v1473 = vsel %vm517, %v1451, %v1457
        %v1474 = vsel %vm520, %v1472, %v1461
        %v1475 = vsel %vm520, %v1473, %v1463
        %v1476 = vsel %vm523, %v1474, %v1467
        %v1477 = vsel %vm523, %v1475, %v1469
        %v1479 = vlaneseq
        %v1480 = vshrl.u32 %v1479, 7
        %v1481 = vsub.s32 0, %v1480
        %v1482 = vrot.slane %v262, %v1481
        %v1484 = vmul.f32 %v1482, %v1476
        %v1485 = vmul.f32 %v1482, %v1477
        %v1486 = vadd.f32 %v1446, %v1484
        %v1487 = vadd.f32 %v1447, %v1485
        %1488 = vrot.lane.b32.xlu0 %v1410, 126
        %v1489 = vpop.permute.xlu0 %1488
        %1490 = vrot.lane.b32.xlu0 %v1411, 126
        %v1491 = vpop.permute.xlu0 %1490
        %1494 = vrot.lane.b32.xlu0 %v1410, 14
        %v1495 = vpop.permute.xlu0 %1494
        %1496 = vrot.lane.b32.xlu0 %v1411, 14
        %v1497 = vpop.permute.xlu0 %1496
        %1500 = vrot.lane.b32.xlu0 %v1410, 30
        %v1501 = vpop.permute.xlu0 %1500
        %1502 = vrot.lane.b32.xlu0 %v1411, 30
        %v1503 = vpop.permute.xlu0 %1502
        %1506 = vrot.lane.b32.xlu0 %v1410, 46
        %v1507 = vpop.permute.xlu0 %1506
        %1508 = vrot.lane.b32.xlu0 %v1411, 46
        %v1509 = vpop.permute.xlu0 %1508
        %v1512 = vsel %vm517, %v1489, %v1495
        %v1513 = vsel %vm517, %v1491, %v1497
        %v1514 = vsel %vm520, %v1512, %v1501
        %v1515 = vsel %vm520, %v1513, %v1503
        %v1516 = vsel %vm523, %v1514, %v1507
        %v1517 = vsel %vm523, %v1515, %v1509
        %v1519 = vlaneseq
        %v1520 = vshrl.u32 %v1519, 7
        %v1521 = vsub.s32 0, %v1520
        %v1522 = vrot.slane %v263, %v1521
        %v1524 = vmul.f32 %v1522, %v1516
        %v1525 = vmul.f32 %v1522, %v1517
        %v1526 = vadd.f32 %v1486, %v1524
        %v1527 = vadd.f32 %v1487, %v1525
        %v1529 = vlaneseq
        %v1530 = vshrl.u32 %v1529, 7
        %v1531 = vsub.s32 0, %v1530
        %v1532 = vrot.slane %v267, %v1531
        %v1534 = vadd.f32 %v1526, %v1532
        %v1535 = vadd.f32 %v1527, %v1532
        %v1536 = vmax.f32 %v1534, 0.0
        %v1537 = vmax.f32 %v1535, 0.0
        %v1538 = vmin.f32 %v1536, 6.0
        %v1539 = vmin.f32 %v1537, 6.0
        %1542 = vrot.lane.b32.xlu0 %v930, 64
        %v1543 = vpop.permute.xlu0 %1542
        %1544 = vrot.lane.b32.xlu0 %v931, 64
        %v1545 = vpop.permute.xlu0 %1544
        %1550 = vrot.lane.b32.xlu0 %v1538, 64
        %v1551 = vpop.permute.xlu0 %1550
        %1552 = vrot.lane.b32.xlu0 %v1539, 64
        %v1553 = vpop.permute.xlu0 %1552
        %vm1556 = vcmask 523264
        %v1557 = vsel %vm1556, %v626, %v1543
        %v1558 = vsel %vm1556, %v627, %v1545
        %v1559 = vsel %vm1556, %v1234, %v1551
        %v1560 = vsel %vm1556, %v1235, %v1553
        %1561 = vst [vmem:[%s251] sm:$0xff] %v1557
        %1562 = vst [vmem:[%s251 + $0x8] sm:$0xff] %v1559
        %1563 = vst [vmem:[%s251 + $0x10] sm:$0xff] %v1558
        %1564 = vst [vmem:[%s251 + $0x18] sm:$0xff] %v1560
        %p1565 = scmp.lt.s32.totalorder %s18, 1
        %s1566 = scalar_select %p1565, %s18, 1
        %s1567 = smul.addr %s1566, 4
        %s1568 = smul.addr %s1567, 8
        %s1569 = scalar_lea.vmem %s5, %s1568
        // Predicated region
        $region49: #{stem_forward.1} parent=39 // pred_check
          %p1570 = pneg %p146
        $region50: #{stem_forward.1} parent=39 // pred_check_branch
          %1572 = sbr.rel (%p1570) target = $region52
        $region51: #{stem_forward.1} parent=39 // pred_region
          _
        $region52: #{stem_forward.1} parent=39 // pred_fallthru
          _
      $region40: #{stem_forward.1} parent=5 // pred_fallthru
        _
      %p1573 = scmp.le.s32.totalorder 2, %s13
      // Predicated region
      $region53: #{stem_forward.1} parent=5 // pred_check
        %p1574 = pneg %p1573
      $region54: #{stem_forward.1} parent=5 // pred_check_branch
        %1576 = sbr.rel (%p1574) target = $region56
      $region55: #{stem_forward.1} parent=5 // pred_region
        %s1577 = ssub.s32 %s13, 2
        // Predicated region
        $region57: #{stem_forward.1} parent=55 // pred_check
          %p1578 = pneg %p152
        $region58: #{stem_forward.1} parent=55 // pred_check_branch
          %1580 = sbr.rel (%p1578) target = $region60
        $region59: #{stem_forward.1} parent=55 // pred_region
          %p1581 = scmp.lt.s32.totalorder %s19, 1
          %s1582 = scalar_select %p1581, %s19, 1
          %s1583 = smul.addr %s1582, 4
          %s1584 = smul.addr %s1583, 8
          %s1585 = scalar_lea.vmem %s5, %s1584
        $region60: #{stem_forward.1} parent=55 // pred_fallthru
          _
      $region56: #{stem_forward.1} parent=5 // pred_fallthru
        _
    $region6: #{stem_forward.1} parent=1 // loop_footer
      %s17 = sadd.s32 1, %s13
    $region7: #{stem_forward.1} parent=1 // loop_footer_branch
      %12 = sbr.rel target = $region3
    $region8: #{stem_forward.1} parent=1 // loop_exit
      _
    %1586 = vsyncpa [#allocation3], 1
    %s1587 = scalar_lea.sflag [#allocation3], 1
    %1588 = vsyncpa %s1587, 1
    %1589 = vsyncpa [#allocation5], 1

</llo_original>
